<compile_context>
chip_gen: v5e
topology: v5e:2x2
jax: 0.10.0
libtpu: 0.0.40
codegen_flags: <defaults>
</compile_context>

<pallas_src>
import math
import jax
import jax.numpy as jnp
from jax.experimental import pallas as pl
from jax.experimental.pallas import tpu as pltpu


D_IMG = 3 * 28 * 28        # 2352 (flattened NCHW input)
D_OUT = 3 * 28 * 28        # 2352
HIDDEN = 100               # logical hidden width (nn.LazyLinear(100))
H_PAD = 128                # hidden padded to a full lane width
D_OUT_PAD = 19 * 128       # 2432, lane-dense output stores
TIME_DIM = 256
MAX_T = 1000


def _round_up(n, m):
    return ((n + m - 1) // m) * m


# ---------------------------------------------------------------------------
# Pallas kernel: fused 3-layer MLP with time-conditioning (one batch tile)
# ---------------------------------------------------------------------------
def mlp_kernel(x_ref, te_ref,
               w1x_ref, w1t_ref, b1_ref,
               w2h_ref, w2t_ref, b2_ref,
               w3_ref, b3_ref,
               o_ref):
    x = x_ref[...]          # (TB, D_IMG)  bf16
    te = te_ref[...]        # (TB, T)      bf16

    # lin1: Linear(concat([x, t_enc])) + ReLU  == x@W1x + te@W1t + b1
    h1 = (jnp.dot(x, w1x_ref[...], preferred_element_type=jnp.float32)
          + jnp.dot(te, w1t_ref[...], preferred_element_type=jnp.float32)
          + b1_ref[...])
    h1 = jnp.maximum(h1, 0.0).astype(jnp.bfloat16)

    # lin2: Linear(concat([h1, t_enc])) + ReLU == h1@W2h + te@W2t + b2
    h2 = (jnp.dot(h1, w2h_ref[...], preferred_element_type=jnp.float32)
          + jnp.dot(te, w2t_ref[...], preferred_element_type=jnp.float32)
          + b2_ref[...])
    h2 = jnp.maximum(h2, 0.0).astype(jnp.bfloat16)

    # lin3: plain Linear (f32 output)
    o_ref[...] = (jnp.dot(h2, w3_ref[...], preferred_element_type=jnp.float32)
                  + b3_ref[...])


def mlp_pallas(x_flat, t_enc, kp, *, tb=256):
    """x_flat: (B, D_IMG) bf16, t_enc: (B, T) bf16, kp: padded kernel params.

    tb: batch tile.  256 fits comfortably on v5e (16 MiB scoped VMEM default),
    v6e and v7x (64 MiB physical).  On v6e one could raise it to 512/1024 with
    a higher vmem_limit_bytes; 256 is the safe cross-generation default.
    """
    B, D_in = x_flat.shape
    T = t_enc.shape[1]
    H = kp["w1x"].shape[1]           # 128
    D_out_pad = kp["w3"].shape[1]    # 2432

    # Pad batch to a multiple of the tile (tile must be a multiple of 8).
    TB = min(tb, _round_up(B, 8))
    Bp = _round_up(B, TB)
    if Bp != B:
        x_flat = jnp.pad(x_flat, ((0, Bp - B), (0, 0)))
        t_enc = jnp.pad(t_enc, ((0, Bp - B), (0, 0)))

    grid = (Bp // TB,)

    # Batch-tiled activations; weights use a constant index_map so the block
    # index never changes -> single DMA, resident in VMEM across grid steps.
    batch_spec = lambda d: pl.BlockSpec((TB, d), lambda i: (i, 0))
    const_spec = lambda r, c: pl.BlockSpec((r, c), lambda i: (0, 0))

    in_specs = [
        batch_spec(D_in),            # x
        batch_spec(T),               # t_enc
        const_spec(D_in, H),         # w1x  (bf16)
        const_spec(T, H),            # w1t  (bf16)
        const_spec(1, H),            # b1   (f32)
        const_spec(H, H),            # w2h  (bf16)
        const_spec(T, H),            # w2t  (bf16)
        const_spec(1, H),            # b2   (f32)
        const_spec(H, D_out_pad),    # w3   (bf16)
        const_spec(1, D_out_pad),    # b3   (f32)
    ]
    out_specs = pl.BlockSpec((TB, D_out_pad), lambda i: (i, 0))

    args = (x_flat, t_enc,
            kp["w1x"], kp["w1t"], kp["b1"],
            kp["w2h"], kp["w2t"], kp["b2"],
            kp["w3"], kp["b3"])

    flops = 2 * Bp * (D_in * H + T * H + H * H + T * H + H * D_out_pad)
    bytes_accessed = (sum(int(a.size) * a.dtype.itemsize for a in args)
                      + Bp * D_out_pad * 4)

    out = pl.pallas_call(
        mlp_kernel,
        out_shape=jax.ShapeDtypeStruct((Bp, D_out_pad), jnp.float32),
        grid=grid,
        in_specs=in_specs,
        out_specs=out_specs,
        compiler_params=pltpu.CompilerParams(
            dimension_semantics=("parallel",),
            vmem_limit_bytes=32 * 1024 * 1024,
        ),
        cost_estimate=pl.CostEstimate(
            flops=flops, transcendentals=0, bytes_accessed=bytes_accessed),
    )(*args)

    return out[:B]   # (B, D_out_pad) f32; caller slices off the column padding


# ---------------------------------------------------------------------------
# Glue: sinusoidal time encoding + parameter init / padding (plain JAX)
# ---------------------------------------------------------------------------
def time_encoding(t, time_dim, max_t):
    # t: (B,) int -> (B, time_dim) f32, interleaved sin/cos
    assert time_dim % 2 == 0, "time_dim must be even"
    t = t.astype(jnp.float32)[:, None]                          # (B, 1)
    half = time_dim // 2
    div = jnp.exp(jnp.arange(half, dtype=jnp.float32)
                  * (-math.log(float(max_t)) / half))           # (half,)
    ang = t * div[None, :]                                      # (B, half)
    pe = jnp.zeros((t.shape[0], time_dim), jnp.float32)
    pe = pe.at[:, 0::2].set(jnp.sin(ang))
    pe = pe.at[:, 1::2].set(jnp.cos(ang))
    return pe


def init_params(key, d_img=D_IMG, time_dim=TIME_DIM, hidden=HIDDEN, d_out=D_OUT):
    """PyTorch-faithful f32 parameters (unpadded, concat weights pre-split)."""
    ks = jax.random.split(key, 6)

    def lin_w(kw, fan_in, fan_out):
        bound = 1.0 / math.sqrt(fan_in)       # nn.Linear default init
        return jax.random.uniform(kw, (fan_in, fan_out), jnp.float32, -bound, bound)

    def lin_b(kb, fan_in, fan_out):
        bound = 1.0 / math.sqrt(fan_in)
        return jax.random.uniform(kb, (1, fan_out), jnp.float32, -bound, bound)

    d1_in = d_img + time_dim
    w1 = lin_w(ks[0], d1_in, hidden)
    b1 = lin_b(ks[1], d1_in, hidden)
    d2_in = hidden + time_dim
    w2 = lin_w(ks[2], d2_in, hidden)
    b2 = lin_b(ks[3], d2_in, hidden)
    w3 = lin_w(ks[4], hidden, d_out)
    b3 = lin_b(ks[5], hidden, d_out)

    return {
        "w1x": w1[:d_img], "w1t": w1[d_img:], "b1": b1,    # split of concat([x, te])
        "w2h": w2[:hidden], "w2t": w2[hidden:], "b2": b2,  # split of concat([h1, te])
        "w3": w3, "b3": b3,
    }


def prepare_kernel_params(p, h_pad=H_PAD, d_out_pad=D_OUT_PAD):
    """Zero-pad hidden->128 and d_out->2432, cast weights to bf16 (biases f32)."""
    def pad_cols(w, c):
        return jnp.pad(w, ((0, 0), (0, c - w.shape[1])))

    def pad_rows(w, r):
        return jnp.pad(w, ((0, r - w.shape[0]), (0, 0)))

    bf16 = jnp.bfloat16
    return {
        "w1x": pad_cols(p["w1x"], h_pad).astype(bf16),
        "w1t": pad_cols(p["w1t"], h_pad).astype(bf16),
        "b1":  pad_cols(p["b1"], h_pad),                                  # f32, pad = 0
        "w2h": pad_cols(pad_rows(p["w2h"], h_pad), h_pad).astype(bf16),
        "w2t": pad_cols(p["w2t"], h_pad).astype(bf16),
        "b2":  pad_cols(p["b2"], h_pad),                                  # f32, pad = 0
        "w3":  pad_cols(pad_rows(p["w3"], h_pad), d_out_pad).astype(bf16),
        "b3":  pad_cols(p["b3"], d_out_pad),                              # f32, pad = 0
    }


def mlp_forward(x, t, kparams, time_dim=TIME_DIM, max_t=MAX_T):
    B = x.shape[0]
    t_enc = time_encoding(t, time_dim, max_t).astype(jnp.bfloat16)   # (B, T)
    x_flat = x.reshape(B, -1).astype(jnp.bfloat16)                   # Flatten
    out = mlp_pallas(x_flat, t_enc, kparams)                         # (B, D_OUT_PAD) f32
    return out[:, :D_OUT].reshape(-1, 3, 28, 28)                     # NCHW, as in PyTorch


# ---------------------------------------------------------------------------
# References for correctness checking
# ---------------------------------------------------------------------------
def mlp_reference_matched(x, t, kp, time_dim=TIME_DIM, max_t=MAX_T):
    """Pure-JAX reference replicating the kernel's bf16-weight/activation math."""
    hi = jax.lax.Precision.HIGHEST
    f32 = jnp.float32
    B = x.shape[0]
    te = time_encoding(t, time_dim, max_t).astype(jnp.bfloat16).astype(f32)
    xf = x.reshape(B, -1).astype(jnp.bfloat16).astype(f32)
    w1x, w1t = kp["w1x"].astype(f32), kp["w1t"].astype(f32)
    w2h, w2t = kp["w2h"].astype(f32), kp["w2t"].astype(f32)
    w3 = kp["w3"].astype(f32)
    h1 = jax.nn.relu(jnp.dot(xf, w1x, precision=hi)
                     + jnp.dot(te, w1t, precision=hi) + kp["b1"])
    h1 = h1.astype(jnp.bfloat16).astype(f32)
    h2 = jax.nn.relu(jnp.dot(h1, w2h, precision=hi)
                     + jnp.dot(te, w2t, precision=hi) + kp["b2"])
    h2 = h2.astype(jnp.bfloat16).astype(f32)
    o = jnp.dot(h2, w3, precision=hi) + kp["b3"]
    return o[:, :D_OUT].reshape(-1, 3, 28, 28)


def mlp_reference_f32(x, t, params, time_dim=TIME_DIM, max_t=MAX_T):
    """Full-precision f32 reference of the original module semantics."""
    hi = jax.lax.Precision.HIGHEST
    B = x.shape[0]
    te = time_encoding(t, time_dim, max_t)
    xf = x.reshape(B, -1).astype(jnp.float32)
    h1 = jax.nn.relu(jnp.dot(xf, params["w1x"], precision=hi)
                     + jnp.dot(te, params["w1t"], precision=hi) + params["b1"])
    h2 = jax.nn.relu(jnp.dot(h1, params["w2h"], precision=hi)
                     + jnp.dot(te, params["w2t"], precision=hi) + params["b2"])
    o = jnp.dot(h2, params["w3"], precision=hi) + params["b3"]
    return o.reshape(-1, 3, 28, 28)


if __name__ == "__main__":
    key = jax.random.PRNGKey(0)
    k_x, k_t, k_p = jax.random.split(key, 3)

    B = 2
    x = jax.random.normal(k_x, (B, 3, 28, 28), jnp.float32)   # NCHW input
    t = jax.random.randint(k_t, (B,), 0, MAX_T)               # diffusion timestep

    params = init_params(k_p)
    kparams = prepare_kernel_params(params)

    out = mlp_forward(x, t, kparams)
    out = jax.block_until_ready(out)

    ref_matched = mlp_reference_matched(x, t, kparams)
    ref_f32 = mlp_reference_f32(x, t, params)

    assert out.shape == (B, 3, 28, 28)
    # tight check vs. a reference using the identical bf16-rounded weights/acts
    assert jnp.allclose(out, ref_matched, atol=1e-3, rtol=1e-3)
    # loose check vs. the original f32 module semantics (bf16 weight rounding)
    assert jnp.allclose(out, ref_f32, atol=5e-2, rtol=5e-2)

    print("KERNEL_OK")
</pallas_src>

<mosaic_0001>
module attributes {stable_mosaic.version = 11 : i64} {
  func.func @mlp_kernel(%arg0: i32, %arg1: memref<8x2352xbf16, #tpu.memory_space<vmem>>, %arg2: memref<8x256xbf16, #tpu.memory_space<vmem>>, %arg3: memref<2352x128xbf16, #tpu.memory_space<vmem>>, %arg4: memref<256x128xbf16, #tpu.memory_space<vmem>>, %arg5: memref<1x128xf32, #tpu.memory_space<vmem>>, %arg6: memref<128x128xbf16, #tpu.memory_space<vmem>>, %arg7: memref<256x128xbf16, #tpu.memory_space<vmem>>, %arg8: memref<1x128xf32, #tpu.memory_space<vmem>>, %arg9: memref<128x2432xbf16, #tpu.memory_space<vmem>>, %arg10: memref<1x2432xf32, #tpu.memory_space<vmem>>, %arg11: memref<8x2432xf32, #tpu.memory_space<vmem>>) attributes {dimension_semantics = [#tpu.dimension_semantics<parallel>], iteration_bounds = array<i64: 1>, scalar_prefetch = 0 : i64, scratch_operands = 0 : i64, tpu.core_type = #tpu.core_type<tc>, window_params = [{transform_indices = @transform_0, window_bounds = array<i64: 8, 2352>}, {transform_indices = @transform_1, window_bounds = array<i64: 8, 256>}, {pipeline_mode = #tpu.pipeline_mode<synchronous>, transform_indices = @transform_2, window_bounds = array<i64: 2352, 128>}, {pipeline_mode = #tpu.pipeline_mode<synchronous>, transform_indices = @transform_3, window_bounds = array<i64: 256, 128>}, {pipeline_mode = #tpu.pipeline_mode<synchronous>, transform_indices = @transform_4, window_bounds = array<i64: 1, 128>}, {pipeline_mode = #tpu.pipeline_mode<synchronous>, transform_indices = @transform_5, window_bounds = array<i64: 128, 128>}, {pipeline_mode = #tpu.pipeline_mode<synchronous>, transform_indices = @transform_6, window_bounds = array<i64: 256, 128>}, {pipeline_mode = #tpu.pipeline_mode<synchronous>, transform_indices = @transform_7, window_bounds = array<i64: 1, 128>}, {pipeline_mode = #tpu.pipeline_mode<synchronous>, transform_indices = @transform_8, window_bounds = array<i64: 128, 2432>}, {pipeline_mode = #tpu.pipeline_mode<synchronous>, transform_indices = @transform_9, window_bounds = array<i64: 1, 2432>}, {transform_indices = @transform_10, window_bounds = array<i64: 8, 2432>}]} {
    %c0 = arith.constant 0 : index
    %c0_0 = arith.constant 0 : index
    %0 = vector.load %arg1[%c0, %c0_0] : memref<8x2352xbf16, #tpu.memory_space<vmem>>, vector<8x2352xbf16>
    %c0_1 = arith.constant 0 : index
    %c0_2 = arith.constant 0 : index
    %1 = vector.load %arg2[%c0_1, %c0_2] : memref<8x256xbf16, #tpu.memory_space<vmem>>, vector<8x256xbf16>
    %c0_3 = arith.constant 0 : index
    %c0_4 = arith.constant 0 : index
    %2 = vector.load %arg3[%c0_3, %c0_4] : memref<2352x128xbf16, #tpu.memory_space<vmem>>, vector<2352x128xbf16>
    %cst = arith.constant dense<0.000000e+00> : vector<8x128xf32>
    %3 = tpu.matmul %0, %2, %cst {dimension_numbers = #tpu.dot_dimension_numbers<[1], [0], [0], [1], [0, 0, 1, 1], [], []>} : vector<8x2352xbf16>, vector<2352x128xbf16>, vector<8x128xf32> -> vector<8x128xf32>
    %c0_5 = arith.constant 0 : index
    %c0_6 = arith.constant 0 : index
    %4 = vector.load %arg4[%c0_5, %c0_6] : memref<256x128xbf16, #tpu.memory_space<vmem>>, vector<256x128xbf16>
    %cst_7 = arith.constant dense<0.000000e+00> : vector<8x128xf32>
    %5 = tpu.matmul %1, %4, %cst_7 {dimension_numbers = #tpu.dot_dimension_numbers<[1], [0], [0], [1], [0, 0, 1, 1], [], []>} : vector<8x256xbf16>, vector<256x128xbf16>, vector<8x128xf32> -> vector<8x128xf32>
    %6 = arith.addf %3, %5 : vector<8x128xf32>
    %c0_8 = arith.constant 0 : index
    %c0_9 = arith.constant 0 : index
    %7 = vector.load %arg5[%c0_8, %c0_9] : memref<1x128xf32, #tpu.memory_space<vmem>>, vector<1x128xf32>
    %8 = vector.broadcast %7 : vector<1x128xf32> to vector<8x128xf32>
    %9 = arith.addf %6, %8 : vector<8x128xf32>
    %cst_10 = arith.constant 0.000000e+00 : f32
    %10 = vector.broadcast %cst_10 : f32 to vector<8x128xf32>
    %11 = arith.maximumf %9, %10 : vector<8x128xf32>
    %12 = arith.truncf %11 : vector<8x128xf32> to vector<8x128xbf16>
    %c0_11 = arith.constant 0 : index
    %c0_12 = arith.constant 0 : index
    %13 = vector.load %arg6[%c0_11, %c0_12] : memref<128x128xbf16, #tpu.memory_space<vmem>>, vector<128x128xbf16>
    %cst_13 = arith.constant dense<0.000000e+00> : vector<8x128xf32>
    %14 = tpu.matmul %12, %13, %cst_13 {dimension_numbers = #tpu.dot_dimension_numbers<[1], [0], [0], [1], [0, 0, 1, 1], [], []>} : vector<8x128xbf16>, vector<128x128xbf16>, vector<8x128xf32> -> vector<8x128xf32>
    %c0_14 = arith.constant 0 : index
    %c0_15 = arith.constant 0 : index
    %15 = vector.load %arg7[%c0_14, %c0_15] : memref<256x128xbf16, #tpu.memory_space<vmem>>, vector<256x128xbf16>
    %cst_16 = arith.constant dense<0.000000e+00> : vector<8x128xf32>
    %16 = tpu.matmul %1, %15, %cst_16 {dimension_numbers = #tpu.dot_dimension_numbers<[1], [0], [0], [1], [0, 0, 1, 1], [], []>} : vector<8x256xbf16>, vector<256x128xbf16>, vector<8x128xf32> -> vector<8x128xf32>
    %17 = arith.addf %14, %16 : vector<8x128xf32>
    %c0_17 = arith.constant 0 : index
    %c0_18 = arith.constant 0 : index
    %18 = vector.load %arg8[%c0_17, %c0_18] : memref<1x128xf32, #tpu.memory_space<vmem>>, vector<1x128xf32>
    %19 = vector.broadcast %18 : vector<1x128xf32> to vector<8x128xf32>
    %20 = arith.addf %17, %19 : vector<8x128xf32>
    %cst_19 = arith.constant 0.000000e+00 : f32
    %21 = vector.broadcast %cst_19 : f32 to vector<8x128xf32>
    %22 = arith.maximumf %20, %21 : vector<8x128xf32>
    %23 = arith.truncf %22 : vector<8x128xf32> to vector<8x128xbf16>
    %c0_20 = arith.constant 0 : index
    %c0_21 = arith.constant 0 : index
    %24 = vector.load %arg9[%c0_20, %c0_21] : memref<128x2432xbf16, #tpu.memory_space<vmem>>, vector<128x2432xbf16>
    %cst_22 = arith.constant dense<0.000000e+00> : vector<8x2432xf32>
    %25 = tpu.matmul %23, %24, %cst_22 {dimension_numbers = #tpu.dot_dimension_numbers<[1], [0], [0], [1], [0, 0, 1, 1], [], []>} : vector<8x128xbf16>, vector<128x2432xbf16>, vector<8x2432xf32> -> vector<8x2432xf32>
    %c0_23 = arith.constant 0 : index
    %c0_24 = arith.constant 0 : index
    %26 = vector.load %arg10[%c0_23, %c0_24] : memref<1x2432xf32, #tpu.memory_space<vmem>>, vector<1x2432xf32>
    %27 = vector.broadcast %26 : vector<1x2432xf32> to vector<8x2432xf32>
    %28 = arith.addf %25, %27 : vector<8x2432xf32>
    %c0_25 = arith.constant 0 : index
    %c0_26 = arith.constant 0 : index
    %29 = vector.load %arg11[%c0_25, %c0_26] : memref<8x2432xf32, #tpu.memory_space<vmem>>, vector<8x2432xf32>
    tpu.vector_store %arg11[%c0_25, %c0_26], %28 {strides = array<i32>} : memref<8x2432xf32, #tpu.memory_space<vmem>>, vector<8x2432xf32>,
    return
  }
  func.func @transform_0(%arg0: i32) -> (i32, i32) {
    %c0_i32 = arith.constant 0 : i32
    %c0_i32_0 = arith.constant 0 : i32
    return %arg0, %c0_i32 : i32, i32
  }
  func.func @transform_1(%arg0: i32) -> (i32, i32) {
    %c0_i32 = arith.constant 0 : i32
    %c0_i32_0 = arith.constant 0 : i32
    return %arg0, %c0_i32 : i32, i32
  }
  func.func @transform_2(%arg0: i32) -> (i32, i32) {
    %c0_i32 = arith.constant 0 : i32
    %c0_i32_0 = arith.constant 0 : i32
    %c0_i32_1 = arith.constant 0 : i32
    return %c0_i32, %c0_i32_0 : i32, i32
  }
  func.func @transform_3(%arg0: i32) -> (i32, i32) {
    %c0_i32 = arith.constant 0 : i32
    %c0_i32_0 = arith.constant 0 : i32
    %c0_i32_1 = arith.constant 0 : i32
    return %c0_i32, %c0_i32_0 : i32, i32
  }
  func.func @transform_4(%arg0: i32) -> (i32, i32) {
    %c0_i32 = arith.constant 0 : i32
    %c0_i32_0 = arith.constant 0 : i32
    %c0_i32_1 = arith.constant 0 : i32
    return %c0_i32, %c0_i32_0 : i32, i32
  }
  func.func @transform_5(%arg0: i32) -> (i32, i32) {
    %c0_i32 = arith.constant 0 : i32
    %c0_i32_0 = arith.constant 0 : i32
    %c0_i32_1 = arith.constant 0 : i32
    return %c0_i32, %c0_i32_0 : i32, i32
  }
  func.func @transform_6(%arg0: i32) -> (i32, i32) {
    %c0_i32 = arith.constant 0 : i32
    %c0_i32_0 = arith.constant 0 : i32
    %c0_i32_1 = arith.constant 0 : i32
    return %c0_i32, %c0_i32_0 : i32, i32
  }
  func.func @transform_7(%arg0: i32) -> (i32, i32) {
    %c0_i32 = arith.constant 0 : i32
    %c0_i32_0 = arith.constant 0 : i32
    %c0_i32_1 = arith.constant 0 : i32
    return %c0_i32, %c0_i32_0 : i32, i32
  }
  func.func @transform_8(%arg0: i32) -> (i32, i32) {
    %c0_i32 = arith.constant 0 : i32
    %c0_i32_0 = arith.constant 0 : i32
    %c0_i32_1 = arith.constant 0 : i32
    return %c0_i32, %c0_i32_0 : i32, i32
  }
  func.func @transform_9(%arg0: i32) -> (i32, i32) {
    %c0_i32 = arith.constant 0 : i32
    %c0_i32_0 = arith.constant 0 : i32
    %c0_i32_1 = arith.constant 0 : i32
    return %c0_i32, %c0_i32_0 : i32, i32
  }
  func.func @transform_10(%arg0: i32) -> (i32, i32) {
    %c0_i32 = arith.constant 0 : i32
    %c0_i32_0 = arith.constant 0 : i32
    return %arg0, %c0_i32 : i32, i32
  }
}

</mosaic_0001>

<llo_original>
// kernel: tpu_custom_call.1
$region0: #{tpu_custom_call.1}
  #allocation0 [shape = 'u32[]', space=smem, size = 0x4, offset = 0x4, fixed_abs, tag = 'smem constant byte address 0x4 - core index']
  #allocation1 [shape = 'u32[72,128]{1,0:T(1,128)}', space=vmem, size = 0x9000, scoped, tag = 'internal scratch']
  %s0 = inlined_call_operand.hbm [shape: bf16[8,2352], index: 0, kind: input, shape index: {}]
  %s1 = inlined_call_operand.hbm [shape: bf16[8,256], index: 1, kind: input, shape index: {}]
  %s2 = inlined_call_operand.hbm [shape: bf16[2352,128], index: 2, kind: input, shape index: {}]
  %s3 = inlined_call_operand.hbm [shape: bf16[256,128], index: 3, kind: input, shape index: {}]
  %s4 = inlined_call_operand.vmem [shape: f32[1,128], index: 4, kind: input, shape index: {}]
  %s5 = inlined_call_operand.hbm [shape: bf16[128,128], index: 5, kind: input, shape index: {}]
  %s6 = inlined_call_operand.hbm [shape: bf16[256,128], index: 6, kind: input, shape index: {}]
  %s7 = inlined_call_operand.vmem [shape: f32[1,128], index: 7, kind: input, shape index: {}]
  %s8 = inlined_call_operand.hbm [shape: bf16[128,2432], index: 8, kind: input, shape index: {}]
  %s9 = inlined_call_operand.hbm [shape: f32[1,2432], index: 9, kind: input, shape index: {}]
  %s10 = inlined_call_operand.hbm [shape: f32[8,2432], index: 10, kind: output, shape index: {}]
  %s11 = sld [smem:[#allocation0]]
  $region82: #{tpu_custom_call.1} parent=0
    _
  %s13 = ssub.s32 1, %s11
  %s14 = scalar_select 0, %s13, %s11
  $region1: #{tpu_custom_call.1} parent=0
    #allocation2 [shape = 'u8[38912]{0}', space=vmem, size = 0x9800, scoped, tag = 'input window, operand 0, single buffered']
    #allocation3 [shape = 's32[1]{0}', space=sflag, size = 0x4, scoped, tag = 'scoped memory for tpu_custom_call.1']
    #allocation4 [shape = 's32[1]{0}', space=sflag, size = 0x4, scoped, tag = 'scoped memory for tpu_custom_call.1']
    #allocation5 [shape = 'u8[4096]{0}', space=vmem, size = 0x1000, scoped, tag = 'input window, operand 1, single buffered']
    #allocation6 [shape = 's32[1]{0}', space=sflag, size = 0x4, scoped, tag = 'scoped memory for tpu_custom_call.1']
    #allocation7 [shape = 'u8[602112]{0}', space=vmem, size = 0x93000, scoped, tag = 'input window, operand 2, single buffered']
    #allocation8 [shape = 'u8[65536]{0}', space=vmem, size = 0x10000, scoped, tag = 'input window, operand 3, single buffered']
    #allocation9 [shape = 's32[1]{0}', space=sflag, size = 0x4, scoped, tag = 'scoped memory for tpu_custom_call.1']
    #allocation10 [shape = 'u8[32768]{0}', space=vmem, size = 0x8000, scoped, tag = 'input window, operand 5, single buffered']
    #allocation11 [shape = 'u8[65536]{0}', space=vmem, size = 0x10000, scoped, tag = 'input window, operand 6, single buffered']
    #allocation12 [shape = 's32[1]{0}', space=sflag, size = 0x4, scoped, tag = 'scoped memory for tpu_custom_call.1']
    #allocation13 [shape = 'u8[622592]{0}', space=vmem, size = 0x98000, scoped, tag = 'input window, operand 8, single buffered']
    #allocation14 [shape = 'u8[9728]{0}', space=vmem, size = 0x2800, scoped, tag = 'input window, operand 9, single buffered']
    #allocation15 [shape = 's32[1]{0}', space=sflag, size = 0x4, scoped, tag = 'scoped memory for tpu_custom_call.1']
    #allocation16 [shape = 'u8[77824]{0}', space=vmem, size = 0x13000, scoped, tag = 'output window, operand 0, single buffered']
    %15 = vsyncpa [#allocation3], 0
    %16 = vsyncpa [#allocation6], 0
    %17 = vsyncpa [#allocation9], 0
    %18 = vsyncpa [#allocation12], 0
    %19 = vsyncpa [#allocation15], 0
    %20 = vsyncpa [#allocation4], 0
    // Predicated region
    $region2: #{tpu_custom_call.1} parent=1 // pred_check
      _
    $region3: #{tpu_custom_call.1} parent=1 // pred_check_branch
      %22 = sbr.rel (0) target = $region5
    $region4: #{tpu_custom_call.1} parent=1 // pred_region
      %24 = vsyncadd [#allocation3], 0
      %s26 = sshll.u32 %s0, 4
      %s27 = int_to_ptr.hbm [resolvable:$true] %s26
      %s28 = sshll.u32 [#allocation2], 4
      %s29 = int_to_ptr.vmem [resolvable:$true] %s28
      %31 = dma.hbm_to_vmem [thread:$0]  %s27, 1216, %s29, [#allocation3]
    $region5: #{tpu_custom_call.1} parent=1 // pred_fallthru
      _
    // Predicated region
    $region6: #{tpu_custom_call.1} parent=1 // pred_check
      _
    $region7: #{tpu_custom_call.1} parent=1 // pred_check_branch
      %33 = sbr.rel (0) target = $region9
    $region8: #{tpu_custom_call.1} parent=1 // pred_region
      %35 = vsyncadd [#allocation6], 0
      %s37 = sshll.u32 %s1, 4
      %s38 = int_to_ptr.hbm [resolvable:$true] %s37
      %s39 = sshll.u32 [#allocation5], 4
      %s40 = int_to_ptr.vmem [resolvable:$true] %s39
      %42 = dma.hbm_to_vmem [thread:$0]  %s38, 128, %s40, [#allocation6]
    $region9: #{tpu_custom_call.1} parent=1 // pred_fallthru
      _
    // Predicated region
    $region10: #{tpu_custom_call.1} parent=1 // pred_check
      _
    $region11: #{tpu_custom_call.1} parent=1 // pred_check_branch
      %44 = sbr.rel (0) target = $region13
    $region12: #{tpu_custom_call.1} parent=1 // pred_region
      %46 = vsyncadd [#allocation6], 0
      %s47 = sshll.u32 %s2, 4
      %s48 = int_to_ptr.hbm [resolvable:$true] %s47
      %s49 = sshll.u32 [#allocation7], 4
      %s50 = int_to_ptr.vmem [resolvable:$true] %s49
      %55 = dma.hbm_to_vmem [thread:$0]  %s48, 18816, %s50, [#allocation6], 64, 64, 4
    $region13: #{tpu_custom_call.1} parent=1 // pred_fallthru
      _
    // Predicated region
    $region14: #{tpu_custom_call.1} parent=1 // pred_check
      _
    $region15: #{tpu_custom_call.1} parent=1 // pred_check_branch
      %57 = sbr.rel (0) target = $region17
    $region16: #{tpu_custom_call.1} parent=1 // pred_region
      %59 = vsyncadd [#allocation9], 0
      %s60 = sshll.u32 %s3, 4
      %s61 = int_to_ptr.hbm [resolvable:$true] %s60
      %s62 = sshll.u32 [#allocation8], 4
      %s63 = int_to_ptr.vmem [resolvable:$true] %s62
      %68 = dma.hbm_to_vmem [thread:$0]  %s61, 2048, %s63, [#allocation9], 64, 64, 4
    $region17: #{tpu_custom_call.1} parent=1 // pred_fallthru
      _
    // Predicated region
    $region18: #{tpu_custom_call.1} parent=1 // pred_check
      _
    $region19: #{tpu_custom_call.1} parent=1 // pred_check_branch
      %70 = sbr.rel (0) target = $region21
    $region20: #{tpu_custom_call.1} parent=1 // pred_region
      _
    $region21: #{tpu_custom_call.1} parent=1 // pred_fallthru
      _
    // Predicated region
    $region22: #{tpu_custom_call.1} parent=1 // pred_check
      _
    $region23: #{tpu_custom_call.1} parent=1 // pred_check_branch
      %72 = sbr.rel (0) target = $region25
    $region24: #{tpu_custom_call.1} parent=1 // pred_region
      %74 = vsyncadd [#allocation9], 0
      %s75 = sshll.u32 %s5, 4
      %s76 = int_to_ptr.hbm [resolvable:$true] %s75
      %s77 = sshll.u32 [#allocation10], 4
      %s78 = int_to_ptr.vmem [resolvable:$true] %s77
      %83 = dma.hbm_to_vmem [thread:$0]  %s76, 1024, %s78, [#allocation9], 64, 64, 4
    $region25: #{tpu_custom_call.1} parent=1 // pred_fallthru
      _
    // Predicated region
    $region26: #{tpu_custom_call.1} parent=1 // pred_check
      _
    $region27: #{tpu_custom_call.1} parent=1 // pred_check_branch
      %85 = sbr.rel (0) target = $region29
    $region28: #{tpu_custom_call.1} parent=1 // pred_region
      %87 = vsyncadd [#allocation12], 0
      %s88 = sshll.u32 %s6, 4
      %s89 = int_to_ptr.hbm [resolvable:$true] %s88
      %s90 = sshll.u32 [#allocation11], 4
      %s91 = int_to_ptr.vmem [resolvable:$true] %s90
      %96 = dma.hbm_to_vmem [thread:$0]  %s89, 2048, %s91, [#allocation12], 64, 64, 4
    $region29: #{tpu_custom_call.1} parent=1 // pred_fallthru
      _
    // Predicated region
    $region30: #{tpu_custom_call.1} parent=1 // pred_check
      _
    $region31: #{tpu_custom_call.1} parent=1 // pred_check_branch
      %98 = sbr.rel (0) target = $region33
    $region32: #{tpu_custom_call.1} parent=1 // pred_region
      _
    $region33: #{tpu_custom_call.1} parent=1 // pred_fallthru
      _
    // Predicated region
    $region34: #{tpu_custom_call.1} parent=1 // pred_check
      _
    $region35: #{tpu_custom_call.1} parent=1 // pred_check_branch
      %100 = sbr.rel (0) target = $region37
    $region36: #{tpu_custom_call.1} parent=1 // pred_region
      %102 = vsyncadd [#allocation12], 0
      %s103 = sshll.u32 %s8, 4
      %s104 = int_to_ptr.hbm [resolvable:$true] %s103
      %s105 = sshll.u32 [#allocation13], 4
      %s106 = int_to_ptr.vmem [resolvable:$true] %s105
      %111 = dma.hbm_to_vmem [thread:$0]  %s104, 19456, %s106, [#allocation12], 1216, 1216, 76
    $region37: #{tpu_custom_call.1} parent=1 // pred_fallthru
      _
    // Predicated region
    $region38: #{tpu_custom_call.1} parent=1 // pred_check
      _
    $region39: #{tpu_custom_call.1} parent=1 // pred_check_branch
      %113 = sbr.rel (0) target = $region41
    $region40: #{tpu_custom_call.1} parent=1 // pred_region
      %115 = vsyncadd [#allocation15], 0
      %s117 = sshll.u32 %s9, 4
      %s118 = int_to_ptr.hbm [resolvable:$true] %s117
      %s119 = sshll.u32 [#allocation14], 4
      %s120 = int_to_ptr.vmem [resolvable:$true] %s119
      %122 = dma.hbm_to_vmem [thread:$0]  %s118, 304, %s120, [#allocation15]
    $region41: #{tpu_custom_call.1} parent=1 // pred_fallthru
      _
    // Predicated region
    $region42: #{tpu_custom_call.1} parent=1 // pred_check
      _
    $region43: #{tpu_custom_call.1} parent=1 // pred_check_branch
      %124 = sbr.rel (0) target = $region45
    $region44: #{tpu_custom_call.1} parent=1 // pred_region
      %126 = dma.done [#allocation3], 1216
    $region45: #{tpu_custom_call.1} parent=1 // pred_fallthru
      _
    // Predicated region
    $region46: #{tpu_custom_call.1} parent=1 // pred_check
      _
    $region47: #{tpu_custom_call.1} parent=1 // pred_check_branch
      %128 = sbr.rel (0) target = $region49
    $region48: #{tpu_custom_call.1} parent=1 // pred_region
      %130 = dma.done [#allocation6], 128
    $region49: #{tpu_custom_call.1} parent=1 // pred_fallthru
      _
    // Predicated region
    $region50: #{tpu_custom_call.1} parent=1 // pred_check
      _
    $region51: #{tpu_custom_call.1} parent=1 // pred_check_branch
      %132 = sbr.rel (0) target = $region53
    $region52: #{tpu_custom_call.1} parent=1 // pred_region
      %134 = dma.done [#allocation6], 18816
    $region53: #{tpu_custom_call.1} parent=1 // pred_fallthru
      _
    // Predicated region
    $region54: #{tpu_custom_call.1} parent=1 // pred_check
      _
    $region55: #{tpu_custom_call.1} parent=1 // pred_check_branch
      %136 = sbr.rel (0) target = $region57
    $region56: #{tpu_custom_call.1} parent=1 // pred_region
      %138 = dma.done [#allocation9], 2048
    $region57: #{tpu_custom_call.1} parent=1 // pred_fallthru
      _
    // Predicated region
    $region58: #{tpu_custom_call.1} parent=1 // pred_check
      _
    $region59: #{tpu_custom_call.1} parent=1 // pred_check_branch
      %140 = sbr.rel (0) target = $region61
    $region60: #{tpu_custom_call.1} parent=1 // pred_region
      %142 = dma.done [#allocation9], 1024
    $region61: #{tpu_custom_call.1} parent=1 // pred_fallthru
      _
    // Predicated region
    $region62: #{tpu_custom_call.1} parent=1 // pred_check
      _
    $region63: #{tpu_custom_call.1} parent=1 // pred_check_branch
      %144 = sbr.rel (0) target = $region65
    $region64: #{tpu_custom_call.1} parent=1 // pred_region
      %146 = dma.done [#allocation12], 2048
    $region65: #{tpu_custom_call.1} parent=1 // pred_fallthru
      _
    // Predicated region
    $region66: #{tpu_custom_call.1} parent=1 // pred_check
      _
    $region67: #{tpu_custom_call.1} parent=1 // pred_check_branch
      %148 = sbr.rel (0) target = $region69
    $region68: #{tpu_custom_call.1} parent=1 // pred_region
      %150 = dma.done [#allocation12], 19456
    $region69: #{tpu_custom_call.1} parent=1 // pred_fallthru
      _
    // Predicated region
    $region70: #{tpu_custom_call.1} parent=1 // pred_check
      _
    $region71: #{tpu_custom_call.1} parent=1 // pred_check_branch
      %152 = sbr.rel (0) target = $region73
    $region72: #{tpu_custom_call.1} parent=1 // pred_region
      %154 = dma.done [#allocation15], 304
    $region73: #{tpu_custom_call.1} parent=1 // pred_fallthru
      _
    %v156 = vld [vmem:[#allocation2] sm:$0xff]
    %v157 = vld [vmem:[#allocation2 + $0x8] sm:$0xff]
    %v158 = vld [vmem:[#allocation2 + $0x10] sm:$0xff]
    %v159 = vld [vmem:[#allocation2 + $0x18] sm:$0xff]
    %v160 = vld [vmem:[#allocation2 + $0x20] sm:$0xff]
    %v161 = vld [vmem:[#allocation2 + $0x28] sm:$0xff]
    %v162 = vld [vmem:[#allocation2 + $0x30] sm:$0xff]
    %v163 = vld [vmem:[#allocation2 + $0x38] sm:$0xff]
    %v164 = vld [vmem:[#allocation2 + $0x40] sm:$0xff]
    %v165 = vld [vmem:[#allocation2 + $0x48] sm:$0xf]
    %v166 = vld [vmem:[#allocation5] sm:$0xff]
    %v167 = vld [vmem:[#allocation7] sm:$0xf]
    %v168 = vld [vmem:[#allocation7 + $0x4] sm:$0xf]
    %v169 = vld [vmem:[#allocation7 + $0x8] sm:$0xf]
    %v170 = vld [vmem:[#allocation7 + $0xc] sm:$0xf]
    %v171 = vld [vmem:[#allocation7 + $0x10] sm:$0xf]
    %v172 = vld [vmem:[#allocation7 + $0x14] sm:$0xf]
    %v173 = vld [vmem:[#allocation7 + $0x18] sm:$0xf]
    %v174 = vld [vmem:[#allocation7 + $0x1c] sm:$0xf]
    %v175 = vld [vmem:[#allocation7 + $0x20] sm:$0xf]
    %v176 = vld [vmem:[#allocation7 + $0x24] sm:$0xf]
    %v177 = vld [vmem:[#allocation7 + $0x28] sm:$0xf]
    %v178 = vld [vmem:[#allocation7 + $0x2c] sm:$0xf]
    %v179 = vld [vmem:[#allocation7 + $0x30] sm:$0xf]
    %v180 = vld [vmem:[#allocation7 + $0x34] sm:$0xf]
    %v181 = vld [vmem:[#allocation7 + $0x38] sm:$0xf]
    %v182 = vld [vmem:[#allocation7 + $0x3c] sm:$0xf]
    %v183 = vld [vmem:[#allocation7 + $0x40] sm:$0xf]
    %v184 = vld [vmem:[#allocation7 + $0x44] sm:$0xf]
    %v185 = vld [vmem:[#allocation7 + $0x48] sm:$0xf]
    %v186 = vld [vmem:[#allocation7 + $0x4c] sm:$0xf]
    %v187 = vld [vmem:[#allocation7 + $0x50] sm:$0xf]
    %v188 = vld [vmem:[#allocation7 + $0x54] sm:$0xf]
    %v189 = vld [vmem:[#allocation7 + $0x58] sm:$0xf]
    %v190 = vld [vmem:[#allocation7 + $0x5c] sm:$0xf]
    %v191 = vld [vmem:[#allocation7 + $0x60] sm:$0xf]
    %v192 = vld [vmem:[#allocation7 + $0x64] sm:$0xf]
    %v193 = vld [vmem:[#allocation7 + $0x68] sm:$0xf]
    %v194 = vld [vmem:[#allocation7 + $0x6c] sm:$0xf]
    %v195 = vld [vmem:[#allocation7 + $0x70] sm:$0xf]
    %v196 = vld [vmem:[#allocation7 + $0x74] sm:$0xf]
    %v197 = vld [vmem:[#allocation7 + $0x78] sm:$0xf]
    %v198 = vld [vmem:[#allocation7 + $0x7c] sm:$0xf]
    %v199 = vld [vmem:[#allocation7 + $0x80] sm:$0xf]
    %v200 = vld [vmem:[#allocation7 + $0x84] sm:$0xf]
    %v201 = vld [vmem:[#allocation7 + $0x88] sm:$0xf]
    %v202 = vld [vmem:[#allocation7 + $0x8c] sm:$0xf]
    %v203 = vld [vmem:[#allocation7 + $0x90] sm:$0xf]
    %v204 = vld [vmem:[#allocation7 + $0x94] sm:$0xf]
    %v205 = vld [vmem:[#allocation7 + $0x98] sm:$0xf]
    %v206 = vld [vmem:[#allocation7 + $0x9c] sm:$0xf]
    %v207 = vld [vmem:[#allocation7 + $0xa0] sm:$0xf]
    %v208 = vld [vmem:[#allocation7 + $0xa4] sm:$0xf]
    %v209 = vld [vmem:[#allocation7 + $0xa8] sm:$0xf]
    %v210 = vld [vmem:[#allocation7 + $0xac] sm:$0xf]
    %v211 = vld [vmem:[#allocation7 + $0xb0] sm:$0xf]
    %v212 = vld [vmem:[#allocation7 + $0xb4] sm:$0xf]
    %v213 = vld [vmem:[#allocation7 + $0xb8] sm:$0xf]
    %v214 = vld [vmem:[#allocation7 + $0xbc] sm:$0xf]
    %v215 = vld [vmem:[#allocation7 + $0xc0] sm:$0xf]
    %v216 = vld [vmem:[#allocation7 + $0xc4] sm:$0xf]
    %v217 = vld [vmem:[#allocation7 + $0xc8] sm:$0xf]
    %v218 = vld [vmem:[#allocation7 + $0xcc] sm:$0xf]
    %v219 = vld [vmem:[#allocation7 + $0xd0] sm:$0xf]
    %v220 = vld [vmem:[#allocation7 + $0xd4] sm:$0xf]
    %v221 = vld [vmem:[#allocation7 + $0xd8] sm:$0xf]
    %v222 = vld [vmem:[#allocation7 + $0xdc] sm:$0xf]
    %v223 = vld [vmem:[#allocation7 + $0xe0] sm:$0xf]
    %v224 = vld [vmem:[#allocation7 + $0xe4] sm:$0xf]
    %v225 = vld [vmem:[#allocation7 + $0xe8] sm:$0xf]
    %v226 = vld [vmem:[#allocation7 + $0xec] sm:$0xf]
    %v227 = vld [vmem:[#allocation7 + $0xf0] sm:$0xf]
    %v228 = vld [vmem:[#allocation7 + $0xf4] sm:$0xf]
    %v229 = vld [vmem:[#allocation7 + $0xf8] sm:$0xf]
    %v230 = vld [vmem:[#allocation7 + $0xfc] sm:$0xf]
    %v231 = vld [vmem:[#allocation7 + $0x100] sm:$0xf]
    %v232 = vld [vmem:[#allocation7 + $0x104] sm:$0xf]
    %v233 = vld [vmem:[#allocation7 + $0x108] sm:$0xf]
    %v234 = vld [vmem:[#allocation7 + $0x10c] sm:$0xf]
    %v235 = vld [vmem:[#allocation7 + $0x110] sm:$0xf]
    %v236 = vld [vmem:[#allocation7 + $0x114] sm:$0xf]
    %v237 = vld [vmem:[#allocation7 + $0x118] sm:$0xf]
    %v238 = vld [vmem:[#allocation7 + $0x11c] sm:$0xf]
    %v239 = vld [vmem:[#allocation7 + $0x120] sm:$0xf]
    %v240 = vld [vmem:[#allocation7 + $0x124] sm:$0xf]
    %v241 = vld [vmem:[#allocation7 + $0x128] sm:$0xf]
    %v242 = vld [vmem:[#allocation7 + $0x12c] sm:$0xf]
    %v243 = vld [vmem:[#allocation7 + $0x130] sm:$0xf]
    %v244 = vld [vmem:[#allocation7 + $0x134] sm:$0xf]
    %v245 = vld [vmem:[#allocation7 + $0x138] sm:$0xf]
    %v246 = vld [vmem:[#allocation7 + $0x13c] sm:$0xf]
    %v247 = vld [vmem:[#allocation7 + $0x140] sm:$0xf]
    %v248 = vld [vmem:[#allocation7 + $0x144] sm:$0xf]
    %v249 = vld [vmem:[#allocation7 + $0x148] sm:$0xf]
    %v250 = vld [vmem:[#allocation7 + $0x14c] sm:$0xf]
    %v251 = vld [vmem:[#allocation7 + $0x150] sm:$0xf]
    %v252 = vld [vmem:[#allocation7 + $0x154] sm:$0xf]
    %v253 = vld [vmem:[#allocation7 + $0x158] sm:$0xf]
    %v254 = vld [vmem:[#allocation7 + $0x15c] sm:$0xf]
    %v255 = vld [vmem:[#allocation7 + $0x160] sm:$0xf]
    %v256 = vld [vmem:[#allocation7 + $0x164] sm:$0xf]
    %v257 = vld [vmem:[#allocation7 + $0x168] sm:$0xf]
    %v258 = vld [vmem:[#allocation7 + $0x16c] sm:$0xf]
    %v259 = vld [vmem:[#allocation7 + $0x170] sm:$0xf]
    %v260 = vld [vmem:[#allocation7 + $0x174] sm:$0xf]
    %v261 = vld [vmem:[#allocation7 + $0x178] sm:$0xf]
    %v262 = vld [vmem:[#allocation7 + $0x17c] sm:$0xf]
    %v263 = vld [vmem:[#allocation7 + $0x180] sm:$0xf]
    %v264 = vld [vmem:[#allocation7 + $0x184] sm:$0xf]
    %v265 = vld [vmem:[#allocation7 + $0x188] sm:$0xf]
    %v266 = vld [vmem:[#allocation7 + $0x18c] sm:$0xf]
    %v267 = vld [vmem:[#allocation7 + $0x190] sm:$0xf]
    %v268 = vld [vmem:[#allocation7 + $0x194] sm:$0xf]
    %v269 = vld [vmem:[#allocation7 + $0x198] sm:$0xf]
    %v270 = vld [vmem:[#allocation7 + $0x19c] sm:$0xf]
    %v271 = vld [vmem:[#allocation7 + $0x1a0] sm:$0xf]
    %v272 = vld [vmem:[#allocation7 + $0x1a4] sm:$0xf]
    %v273 = vld [vmem:[#allocation7 + $0x1a8] sm:$0xf]
    %v274 = vld [vmem:[#allocation7 + $0x1ac] sm:$0xf]
    %v275 = vld [vmem:[#allocation7 + $0x1b0] sm:$0xf]
    %v276 = vld [vmem:[#allocation7 + $0x1b4] sm:$0xf]
    %v277 = vld [vmem:[#allocation7 + $0x1b8] sm:$0xf]
    %v278 = vld [vmem:[#allocation7 + $0x1bc] sm:$0xf]
    %v279 = vld [vmem:[#allocation7 + $0x1c0] sm:$0xf]
    %v280 = vld [vmem:[#allocation7 + $0x1c4] sm:$0xf]
    %v281 = vld [vmem:[#allocation7 + $0x1c8] sm:$0xf]
    %v282 = vld [vmem:[#allocation7 + $0x1cc] sm:$0xf]
    %v283 = vld [vmem:[#allocation7 + $0x1d0] sm:$0xf]
    %v284 = vld [vmem:[#allocation7 + $0x1d4] sm:$0xf]
    %v285 = vld [vmem:[#allocation7 + $0x1d8] sm:$0xf]
    %v286 = vld [vmem:[#allocation7 + $0x1dc] sm:$0xf]
    %v287 = vld [vmem:[#allocation7 + $0x1e0] sm:$0xf]
    %v288 = vld [vmem:[#allocation7 + $0x1e4] sm:$0xf]
    %v289 = vld [vmem:[#allocation7 + $0x1e8] sm:$0xf]
    %v290 = vld [vmem:[#allocation7 + $0x1ec] sm:$0xf]
    %v291 = vld [vmem:[#allocation7 + $0x1f0] sm:$0xf]
    %v292 = vld [vmem:[#allocation7 + $0x1f4] sm:$0xf]
    %v293 = vld [vmem:[#allocation7 + $0x1f8] sm:$0xf]
    %v294 = vld [vmem:[#allocation7 + $0x1fc] sm:$0xf]
    %v295 = vld [vmem:[#allocation7 + $0x200] sm:$0xf]
    %v296 = vld [vmem:[#allocation7 + $0x204] sm:$0xf]
    %v297 = vld [vmem:[#allocation7 + $0x208] sm:$0xf]
    %v298 = vld [vmem:[#allocation7 + $0x20c] sm:$0xf]
    %v299 = vld [vmem:[#allocation7 + $0x210] sm:$0xf]
    %v300 = vld [vmem:[#allocation7 + $0x214] sm:$0xf]
    %v301 = vld [vmem:[#allocation7 + $0x218] sm:$0xf]
    %v302 = vld [vmem:[#allocation7 + $0x21c] sm:$0xf]
    %v303 = vld [vmem:[#allocation7 + $0x220] sm:$0xf]
    %v304 = vld [vmem:[#allocation7 + $0x224] sm:$0xf]
    %v305 = vld [vmem:[#allocation7 + $0x228] sm:$0xf]
    %v306 = vld [vmem:[#allocation7 + $0x22c] sm:$0xf]
    %v307 = vld [vmem:[#allocation7 + $0x230] sm:$0xf]
    %v308 = vld [vmem:[#allocation7 + $0x234] sm:$0xf]
    %v309 = vld [vmem:[#allocation7 + $0x238] sm:$0xf]
    %v310 = vld [vmem:[#allocation7 + $0x23c] sm:$0xf]
    %v311 = vld [vmem:[#allocation7 + $0x240] sm:$0xf]
    %v312 = vld [vmem:[#allocation7 + $0x244] sm:$0xf]
    %v313 = vld [vmem:[#allocation7 + $0x248] sm:$0xf]
    %v314 = vld [vmem:[#allocation7 + $0x24c] sm:$0xf]
    %v315 = vld [vmem:[#allocation7 + $0x250] sm:$0xf]
    %v316 = vld [vmem:[#allocation7 + $0x254] sm:$0xf]
    %v317 = vld [vmem:[#allocation7 + $0x258] sm:$0xf]
    %v318 = vld [vmem:[#allocation7 + $0x25c] sm:$0xf]
    %v319 = vld [vmem:[#allocation7 + $0x260] sm:$0xf]
    %v320 = vld [vmem:[#allocation7 + $0x264] sm:$0xf]
    %v321 = vld [vmem:[#allocation7 + $0x268] sm:$0xf]
    %v322 = vld [vmem:[#allocation7 + $0x26c] sm:$0xf]
    %v323 = vld [vmem:[#allocation7 + $0x270] sm:$0xf]
    %v324 = vld [vmem:[#allocation7 + $0x274] sm:$0xf]
    %v325 = vld [vmem:[#allocation7 + $0x278] sm:$0xf]
    %v326 = vld [vmem:[#allocation7 + $0x27c] sm:$0xf]
    %v327 = vld [vmem:[#allocation7 + $0x280] sm:$0xf]
    %v328 = vld [vmem:[#allocation7 + $0x284] sm:$0xf]
    %v329 = vld [vmem:[#allocation7 + $0x288] sm:$0xf]
    %v330 = vld [vmem:[#allocation7 + $0x28c] sm:$0xf]
    %v331 = vld [vmem:[#allocation7 + $0x290] sm:$0xf]
    %v332 = vld [vmem:[#allocation7 + $0x294] sm:$0xf]
    %v333 = vld [vmem:[#allocation7 + $0x298] sm:$0xf]
    %v334 = vld [vmem:[#allocation7 + $0x29c] sm:$0xf]
    %v335 = vld [vmem:[#allocation7 + $0x2a0] sm:$0xf]
    %v336 = vld [vmem:[#allocation7 + $0x2a4] sm:$0xf]
    %v337 = vld [vmem:[#allocation7 + $0x2a8] sm:$0xf]
    %v338 = vld [vmem:[#allocation7 + $0x2ac] sm:$0xf]
    %v339 = vld [vmem:[#allocation7 + $0x2b0] sm:$0xf]
    %v340 = vld [vmem:[#allocation7 + $0x2b4] sm:$0xf]
    %v341 = vld [vmem:[#allocation7 + $0x2b8] sm:$0xf]
    %v342 = vld [vmem:[#allocation7 + $0x2bc] sm:$0xf]
    %v343 = vld [vmem:[#allocation7 + $0x2c0] sm:$0xf]
    %v344 = vld [vmem:[#allocation7 + $0x2c4] sm:$0xf]
    %v345 = vld [vmem:[#allocation7 + $0x2c8] sm:$0xf]
    %v346 = vld [vmem:[#allocation7 + $0x2cc] sm:$0xf]
    %v347 = vld [vmem:[#allocation7 + $0x2d0] sm:$0xf]
    %v348 = vld [vmem:[#allocation7 + $0x2d4] sm:$0xf]
    %v349 = vld [vmem:[#allocation7 + $0x2d8] sm:$0xf]
    %v350 = vld [vmem:[#allocation7 + $0x2dc] sm:$0xf]
    %v351 = vld [vmem:[#allocation7 + $0x2e0] sm:$0xf]
    %v352 = vld [vmem:[#allocation7 + $0x2e4] sm:$0xf]
    %v353 = vld [vmem:[#allocation7 + $0x2e8] sm:$0xf]
    %v354 = vld [vmem:[#allocation7 + $0x2ec] sm:$0xf]
    %v355 = vld [vmem:[#allocation7 + $0x2f0] sm:$0xf]
    %v356 = vld [vmem:[#allocation7 + $0x2f4] sm:$0xf]
    %v357 = vld [vmem:[#allocation7 + $0x2f8] sm:$0xf]
    %v358 = vld [vmem:[#allocation7 + $0x2fc] sm:$0xf]
    %v359 = vld [vmem:[#allocation7 + $0x300] sm:$0xf]
    %v360 = vld [vmem:[#allocation7 + $0x304] sm:$0xf]
    %v361 = vld [vmem:[#allocation7 + $0x308] sm:$0xf]
    %v362 = vld [vmem:[#allocation7 + $0x30c] sm:$0xf]
    %v363 = vld [vmem:[#allocation7 + $0x310] sm:$0xf]
    %v364 = vld [vmem:[#allocation7 + $0x314] sm:$0xf]
    %v365 = vld [vmem:[#allocation7 + $0x318] sm:$0xf]
    %v366 = vld [vmem:[#allocation7 + $0x31c] sm:$0xf]
    %v367 = vld [vmem:[#allocation7 + $0x320] sm:$0xf]
    %v368 = vld [vmem:[#allocation7 + $0x324] sm:$0xf]
    %v369 = vld [vmem:[#allocation7 + $0x328] sm:$0xf]
    %v370 = vld [vmem:[#allocation7 + $0x32c] sm:$0xf]
    %v371 = vld [vmem:[#allocation7 + $0x330] sm:$0xf]
    %v372 = vld [vmem:[#allocation7 + $0x334] sm:$0xf]
    %v373 = vld [vmem:[#allocation7 + $0x338] sm:$0xf]
    %v374 = vld [vmem:[#allocation7 + $0x33c] sm:$0xf]
    %v375 = vld [vmem:[#allocation7 + $0x340] sm:$0xf]
    %v376 = vld [vmem:[#allocation7 + $0x344] sm:$0xf]
    %v377 = vld [vmem:[#allocation7 + $0x348] sm:$0xf]
    %v378 = vld [vmem:[#allocation7 + $0x34c] sm:$0xf]
    %v379 = vld [vmem:[#allocation7 + $0x350] sm:$0xf]
    %v380 = vld [vmem:[#allocation7 + $0x354] sm:$0xf]
    %v381 = vld [vmem:[#allocation7 + $0x358] sm:$0xf]
    %v382 = vld [vmem:[#allocation7 + $0x35c] sm:$0xf]
    %v383 = vld [vmem:[#allocation7 + $0x360] sm:$0xf]
    %v384 = vld [vmem:[#allocation7 + $0x364] sm:$0xf]
    %v385 = vld [vmem:[#allocation7 + $0x368] sm:$0xf]
    %v386 = vld [vmem:[#allocation7 + $0x36c] sm:$0xf]
    %v387 = vld [vmem:[#allocation7 + $0x370] sm:$0xf]
    %v388 = vld [vmem:[#allocation7 + $0x374] sm:$0xf]
    %v389 = vld [vmem:[#allocation7 + $0x378] sm:$0xf]
    %v390 = vld [vmem:[#allocation7 + $0x37c] sm:$0xf]
    %v391 = vld [vmem:[#allocation7 + $0x380] sm:$0xf]
    %v392 = vld [vmem:[#allocation7 + $0x384] sm:$0xf]
    %v393 = vld [vmem:[#allocation7 + $0x388] sm:$0xf]
    %v394 = vld [vmem:[#allocation7 + $0x38c] sm:$0xf]
    %v395 = vld [vmem:[#allocation7 + $0x390] sm:$0xf]
    %v396 = vld [vmem:[#allocation7 + $0x394] sm:$0xf]
    %v397 = vld [vmem:[#allocation7 + $0x398] sm:$0xf]
    %v398 = vld [vmem:[#allocation7 + $0x39c] sm:$0xf]
    %v399 = vld [vmem:[#allocation7 + $0x3a0] sm:$0xf]
    %v400 = vld [vmem:[#allocation7 + $0x3a4] sm:$0xf]
    %v401 = vld [vmem:[#allocation7 + $0x3a8] sm:$0xf]
    %v402 = vld [vmem:[#allocation7 + $0x3ac] sm:$0xf]
    %v403 = vld [vmem:[#allocation7 + $0x3b0] sm:$0xf]
    %v404 = vld [vmem:[#allocation7 + $0x3b4] sm:$0xf]
    %v405 = vld [vmem:[#allocation7 + $0x3b8] sm:$0xf]
    %v406 = vld [vmem:[#allocation7 + $0x3bc] sm:$0xf]
    %v407 = vld [vmem:[#allocation7 + $0x3c0] sm:$0xf]
    %v408 = vld [vmem:[#allocation7 + $0x3c4] sm:$0xf]
    %v409 = vld [vmem:[#allocation7 + $0x3c8] sm:$0xf]
    %v410 = vld [vmem:[#allocation7 + $0x3cc] sm:$0xf]
    %v411 = vld [vmem:[#allocation7 + $0x3d0] sm:$0xf]
    %v412 = vld [vmem:[#allocation7 + $0x3d4] sm:$0xf]
    %v413 = vld [vmem:[#allocation7 + $0x3d8] sm:$0xf]
    %v414 = vld [vmem:[#allocation7 + $0x3dc] sm:$0xf]
    %v415 = vld [vmem:[#allocation7 + $0x3e0] sm:$0xf]
    %v416 = vld [vmem:[#allocation7 + $0x3e4] sm:$0xf]
    %v417 = vld [vmem:[#allocation7 + $0x3e8] sm:$0xf]
    %v418 = vld [vmem:[#allocation7 + $0x3ec] sm:$0xf]
    %v419 = vld [vmem:[#allocation7 + $0x3f0] sm:$0xf]
    %v420 = vld [vmem:[#allocation7 + $0x3f4] sm:$0xf]
    %v421 = vld [vmem:[#allocation7 + $0x3f8] sm:$0xf]
    %v422 = vld [vmem:[#allocation7 + $0x3fc] sm:$0xf]
    %v423 = vld [vmem:[#allocation7 + $0x400] sm:$0xf]
    %v424 = vld [vmem:[#allocation7 + $0x404] sm:$0xf]
    %v425 = vld [vmem:[#allocation7 + $0x408] sm:$0xf]
    %v426 = vld [vmem:[#allocation7 + $0x40c] sm:$0xf]
    %v427 = vld [vmem:[#allocation7 + $0x410] sm:$0xf]
    %v428 = vld [vmem:[#allocation7 + $0x414] sm:$0xf]
    %v429 = vld [vmem:[#allocation7 + $0x418] sm:$0xf]
    %v430 = vld [vmem:[#allocation7 + $0x41c] sm:$0xf]
    %v431 = vld [vmem:[#allocation7 + $0x420] sm:$0xf]
    %v432 = vld [vmem:[#allocation7 + $0x424] sm:$0xf]
    %v433 = vld [vmem:[#allocation7 + $0x428] sm:$0xf]
    %v434 = vld [vmem:[#allocation7 + $0x42c] sm:$0xf]
    %v435 = vld [vmem:[#allocation7 + $0x430] sm:$0xf]
    %v436 = vld [vmem:[#allocation7 + $0x434] sm:$0xf]
    %v437 = vld [vmem:[#allocation7 + $0x438] sm:$0xf]
    %v438 = vld [vmem:[#allocation7 + $0x43c] sm:$0xf]
    %v439 = vld [vmem:[#allocation7 + $0x440] sm:$0xf]
    %v440 = vld [vmem:[#allocation7 + $0x444] sm:$0xf]
    %v441 = vld [vmem:[#allocation7 + $0x448] sm:$0xf]
    %v442 = vld [vmem:[#allocation7 + $0x44c] sm:$0xf]
    %v443 = vld [vmem:[#allocation7 + $0x450] sm:$0xf]
    %v444 = vld [vmem:[#allocation7 + $0x454] sm:$0xf]
    %v445 = vld [vmem:[#allocation7 + $0x458] sm:$0xf]
    %v446 = vld [vmem:[#allocation7 + $0x45c] sm:$0xf]
    %v447 = vld [vmem:[#allocation7 + $0x460] sm:$0xf]
    %v448 = vld [vmem:[#allocation7 + $0x464] sm:$0xf]
    %v449 = vld [vmem:[#allocation7 + $0x468] sm:$0xf]
    %v450 = vld [vmem:[#allocation7 + $0x46c] sm:$0xf]
    %v451 = vld [vmem:[#allocation7 + $0x470] sm:$0xf]
    %v452 = vld [vmem:[#allocation7 + $0x474] sm:$0xf]
    %v453 = vld [vmem:[#allocation7 + $0x478] sm:$0xf]
    %v454 = vld [vmem:[#allocation7 + $0x47c] sm:$0xf]
    %v455 = vld [vmem:[#allocation7 + $0x480] sm:$0xf]
    %v456 = vld [vmem:[#allocation7 + $0x484] sm:$0xf]
    %v457 = vld [vmem:[#allocation7 + $0x488] sm:$0xf]
    %v458 = vld [vmem:[#allocation7 + $0x48c] sm:$0xf]
    %v459 = vld [vmem:[#allocation7 + $0x490] sm:$0xf]
    %v460 = vld [vmem:[#allocation7 + $0x494] sm:$0xf]
    %v461 = vld [vmem:[#allocation8] sm:$0xf]
    %v462 = vld [vmem:[#allocation8 + $0x4] sm:$0xf]
    %v463 = vld [vmem:[#allocation8 + $0x8] sm:$0xf]
    %v464 = vld [vmem:[#allocation8 + $0xc] sm:$0xf]
    %v465 = vld [vmem:[#allocation8 + $0x10] sm:$0xf]
    %v466 = vld [vmem:[#allocation8 + $0x14] sm:$0xf]
    %v467 = vld [vmem:[#allocation8 + $0x18] sm:$0xf]
    %v468 = vld [vmem:[#allocation8 + $0x1c] sm:$0xf]
    %v469 = vld [vmem:[#allocation8 + $0x20] sm:$0xf]
    %v470 = vld [vmem:[#allocation8 + $0x24] sm:$0xf]
    %v471 = vld [vmem:[#allocation8 + $0x28] sm:$0xf]
    %v472 = vld [vmem:[#allocation8 + $0x2c] sm:$0xf]
    %v473 = vld [vmem:[#allocation8 + $0x30] sm:$0xf]
    %v474 = vld [vmem:[#allocation8 + $0x34] sm:$0xf]
    %v475 = vld [vmem:[#allocation8 + $0x38] sm:$0xf]
    %v476 = vld [vmem:[#allocation8 + $0x3c] sm:$0xf]
    %v477 = vld [vmem:[#allocation8 + $0x40] sm:$0xf]
    %v478 = vld [vmem:[#allocation8 + $0x44] sm:$0xf]
    %v479 = vld [vmem:[#allocation8 + $0x48] sm:$0xf]
    %v480 = vld [vmem:[#allocation8 + $0x4c] sm:$0xf]
    %v481 = vld [vmem:[#allocation8 + $0x50] sm:$0xf]
    %v482 = vld [vmem:[#allocation8 + $0x54] sm:$0xf]
    %v483 = vld [vmem:[#allocation8 + $0x58] sm:$0xf]
    %v484 = vld [vmem:[#allocation8 + $0x5c] sm:$0xf]
    %v485 = vld [vmem:[#allocation8 + $0x60] sm:$0xf]
    %v486 = vld [vmem:[#allocation8 + $0x64] sm:$0xf]
    %v487 = vld [vmem:[#allocation8 + $0x68] sm:$0xf]
    %v488 = vld [vmem:[#allocation8 + $0x6c] sm:$0xf]
    %v489 = vld [vmem:[#allocation8 + $0x70] sm:$0xf]
    %v490 = vld [vmem:[#allocation8 + $0x74] sm:$0xf]
    %v491 = vld [vmem:[#allocation8 + $0x78] sm:$0xf]
    %v492 = vld [vmem:[#allocation8 + $0x7c] sm:$0xf]
    %v494 = vunpack.c.l.b16 %v166
    %v495 = vunpack.c.h.b16 %v166
    %v496 = vpack.c.b16 %v494, %v494
    %v497 = vpack.c.b16 %v495, %v495
    %v532 = vunpack.c.l.b16 %v461
    %v533 = vunpack.c.l.b16 %v462
    %v534 = vunpack.c.l.b16 %v463
    %v535 = vunpack.c.l.b16 %v464
    %v536 = vunpack.c.l.b16 %v465
    %v537 = vunpack.c.l.b16 %v466
    %v538 = vunpack.c.l.b16 %v467
    %v539 = vunpack.c.l.b16 %v468
    %v540 = vunpack.c.l.b16 %v469
    %v541 = vunpack.c.l.b16 %v470
    %v542 = vunpack.c.l.b16 %v471
    %v543 = vunpack.c.l.b16 %v472
    %v544 = vunpack.c.l.b16 %v473
    %v545 = vunpack.c.l.b16 %v474
    %v546 = vunpack.c.l.b16 %v475
    %v547 = vunpack.c.l.b16 %v476
    %v548 = vunpack.c.l.b16 %v477
    %v549 = vunpack.c.l.b16 %v478
    %v550 = vunpack.c.l.b16 %v479
    %v551 = vunpack.c.l.b16 %v480
    %v552 = vunpack.c.l.b16 %v481
    %v553 = vunpack.c.l.b16 %v482
    %v554 = vunpack.c.l.b16 %v483
    %v555 = vunpack.c.l.b16 %v484
    %v556 = vunpack.c.l.b16 %v485
    %v557 = vunpack.c.l.b16 %v486
    %v558 = vunpack.c.l.b16 %v487
    %v559 = vunpack.c.l.b16 %v488
    %v560 = vunpack.c.l.b16 %v489
    %v561 = vunpack.c.l.b16 %v490
    %v562 = vunpack.c.l.b16 %v491
    %v563 = vunpack.c.l.b16 %v492
    %v564 = vpack.c.b16 %v533, %v532
    %v565 = vpack.c.b16 %v535, %v534
    %v566 = vpack.c.b16 %v537, %v536
    %v567 = vpack.c.b16 %v539, %v538
    %v568 = vpack.c.b16 %v541, %v540
    %v569 = vpack.c.b16 %v543, %v542
    %v570 = vpack.c.b16 %v545, %v544
    %v571 = vpack.c.b16 %v547, %v546
    %v572 = vpack.c.b16 %v549, %v548
    %v573 = vpack.c.b16 %v551, %v550
    %v574 = vpack.c.b16 %v553, %v552
    %v575 = vpack.c.b16 %v555, %v554
    %v576 = vpack.c.b16 %v557, %v556
    %v577 = vpack.c.b16 %v559, %v558
    %v578 = vpack.c.b16 %v561, %v560
    %v579 = vpack.c.b16 %v563, %v562
    %596 = vmatpush.bf16.msra.mxu0 %v571
    %597 = vmatpush.bf16.msra.mxu0 %v570
    %598 = vmatpush.bf16.msra.mxu0 %v569
    %599 = vmatpush.bf16.msra.mxu0 %v568
    %600 = vmatpush.bf16.msra.mxu0 %v567
    %601 = vmatpush.bf16.msra.mxu0 %v566
    %602 = vmatpush.bf16.msra.mxu0 %v565
    %603 = vmatpush.bf16.msra.mxu0 %v564
    %604 = vmatmul.bf16.gmra.mxu0 %v496
    %v605 = vpop.f32.mrf.mxu0
    %v606 = vadd.f32 0.0, %v605
    %v607 = vpop.f32.mrf.mxu0
    %608 = vdwg.mxu0
    %609 = vmatpush.bf16.msra.mxu0 %v579
    %610 = vmatpush.bf16.msra.mxu0 %v578
    %611 = vmatpush.bf16.msra.mxu0 %v577
    %612 = vmatpush.bf16.msra.mxu0 %v576
    %613 = vmatpush.bf16.msra.mxu0 %v575
    %614 = vmatpush.bf16.msra.mxu0 %v574
    %615 = vmatpush.bf16.msra.mxu0 %v573
    %616 = vmatpush.bf16.msra.mxu0 %v572
    %617 = vmatmul.bf16.gmra.mxu0 %v497
    %v618 = vpop.f32.mrf.mxu0
    %v619 = vadd.f32 %v606, %v618
    %v620 = vpop.f32.mrf.mxu0
    %621 = vdwg.mxu0
    %v632 = vunpack.c.l.b16 %v156
    %v633 = vunpack.c.h.b16 %v156
    %v634 = vunpack.c.l.b16 %v157
    %v635 = vunpack.c.h.b16 %v157
    %v636 = vunpack.c.l.b16 %v158
    %v637 = vunpack.c.h.b16 %v158
    %v638 = vunpack.c.l.b16 %v159
    %v639 = vunpack.c.h.b16 %v159
    %v640 = vunpack.c.l.b16 %v160
    %v641 = vunpack.c.h.b16 %v160
    %v642 = vunpack.c.l.b16 %v161
    %v643 = vunpack.c.h.b16 %v161
    %v644 = vunpack.c.l.b16 %v162
    %v645 = vunpack.c.h.b16 %v162
    %v646 = vunpack.c.l.b16 %v163
    %v647 = vunpack.c.h.b16 %v163
    %v648 = vunpack.c.l.b16 %v164
    %v649 = vunpack.c.h.b16 %v164
    %v650 = vunpack.c.l.b16 %v165
    %v651 = vpack.c.b16 %v632, %v632
    %v652 = vpack.c.b16 %v633, %v633
    %v653 = vpack.c.b16 %v634, %v634
    %v654 = vpack.c.b16 %v635, %v635
    %v655 = vpack.c.b16 %v636, %v636
    %v656 = vpack.c.b16 %v637, %v637
    %v657 = vpack.c.b16 %v638, %v638
    %v658 = vpack.c.b16 %v639, %v639
    %v659 = vpack.c.b16 %v640, %v640
    %v660 = vpack.c.b16 %v641, %v641
    %v661 = vpack.c.b16 %v642, %v642
    %v662 = vpack.c.b16 %v643, %v643
    %v663 = vpack.c.b16 %v644, %v644
    %v664 = vpack.c.b16 %v645, %v645
    %v665 = vpack.c.b16 %v646, %v646
    %v666 = vpack.c.b16 %v647, %v647
    %v667 = vpack.c.b16 %v648, %v648
    %v668 = vpack.c.b16 %v649, %v649
    %v669 = vpack.c.b16 %v650, %v650
    %v982 = vunpack.c.l.b16 %v167
    %v983 = vunpack.c.l.b16 %v168
    %v984 = vunpack.c.l.b16 %v169
    %v985 = vunpack.c.l.b16 %v170
    %v986 = vunpack.c.l.b16 %v171
    %v987 = vunpack.c.l.b16 %v172
    %v988 = vunpack.c.l.b16 %v173
    %v989 = vunpack.c.l.b16 %v174
    %v990 = vunpack.c.l.b16 %v175
    %v991 = vunpack.c.l.b16 %v176
    %v992 = vunpack.c.l.b16 %v177
    %v993 = vunpack.c.l.b16 %v178
    %v994 = vunpack.c.l.b16 %v179
    %v995 = vunpack.c.l.b16 %v180
    %v996 = vunpack.c.l.b16 %v181
    %v997 = vunpack.c.l.b16 %v182
    %v998 = vunpack.c.l.b16 %v183
    %v999 = vunpack.c.l.b16 %v184
    %v1000 = vunpack.c.l.b16 %v185
    %v1001 = vunpack.c.l.b16 %v186
    %v1002 = vunpack.c.l.b16 %v187
    %v1003 = vunpack.c.l.b16 %v188
    %v1004 = vunpack.c.l.b16 %v189
    %v1005 = vunpack.c.l.b16 %v190
    %v1006 = vunpack.c.l.b16 %v191
    %v1007 = vunpack.c.l.b16 %v192
    %v1008 = vunpack.c.l.b16 %v193
    %v1009 = vunpack.c.l.b16 %v194
    %v1010 = vunpack.c.l.b16 %v195
    %v1011 = vunpack.c.l.b16 %v196
    %v1012 = vunpack.c.l.b16 %v197
    %v1013 = vunpack.c.l.b16 %v198
    %v1014 = vunpack.c.l.b16 %v199
    %v1015 = vunpack.c.l.b16 %v200
    %v1016 = vunpack.c.l.b16 %v201
    %v1017 = vunpack.c.l.b16 %v202
    %v1018 = vunpack.c.l.b16 %v203
    %v1019 = vunpack.c.l.b16 %v204
    %v1020 = vunpack.c.l.b16 %v205
    %v1021 = vunpack.c.l.b16 %v206
    %v1022 = vunpack.c.l.b16 %v207
    %v1023 = vunpack.c.l.b16 %v208
    %v1024 = vunpack.c.l.b16 %v209
    %v1025 = vunpack.c.l.b16 %v210
    %v1026 = vunpack.c.l.b16 %v211
    %v1027 = vunpack.c.l.b16 %v212
    %v1028 = vunpack.c.l.b16 %v213
    %v1029 = vunpack.c.l.b16 %v214
    %v1030 = vunpack.c.l.b16 %v215
    %v1031 = vunpack.c.l.b16 %v216
    %v1032 = vunpack.c.l.b16 %v217
    %v1033 = vunpack.c.l.b16 %v218
    %v1034 = vunpack.c.l.b16 %v219
    %v1035 = vunpack.c.l.b16 %v220
    %v1036 = vunpack.c.l.b16 %v221
    %v1037 = vunpack.c.l.b16 %v222
    %v1038 = vunpack.c.l.b16 %v223
    %v1039 = vunpack.c.l.b16 %v224
    %v1040 = vunpack.c.l.b16 %v225
    %v1041 = vunpack.c.l.b16 %v226
    %v1042 = vunpack.c.l.b16 %v227
    %v1043 = vunpack.c.l.b16 %v228
    %v1044 = vunpack.c.l.b16 %v229
    %v1045 = vunpack.c.l.b16 %v230
    %v1046 = vunpack.c.l.b16 %v231
    %v1047 = vunpack.c.l.b16 %v232
    %v1048 = vunpack.c.l.b16 %v233
    %v1049 = vunpack.c.l.b16 %v234
    %v1050 = vunpack.c.l.b16 %v235
    %v1051 = vunpack.c.l.b16 %v236
    %v1052 = vunpack.c.l.b16 %v237
    %v1053 = vunpack.c.l.b16 %v238
    %v1054 = vunpack.c.l.b16 %v239
    %v1055 = vunpack.c.l.b16 %v240
    %v1056 = vunpack.c.l.b16 %v241
    %v1057 = vunpack.c.l.b16 %v242
    %v1058 = vunpack.c.l.b16 %v243
    %v1059 = vunpack.c.l.b16 %v244
    %v1060 = vunpack.c.l.b16 %v245
    %v1061 = vunpack.c.l.b16 %v246
    %v1062 = vunpack.c.l.b16 %v247
    %v1063 = vunpack.c.l.b16 %v248
    %v1064 = vunpack.c.l.b16 %v249
    %v1065 = vunpack.c.l.b16 %v250
    %v1066 = vunpack.c.l.b16 %v251
    %v1067 = vunpack.c.l.b16 %v252
    %v1068 = vunpack.c.l.b16 %v253
    %v1069 = vunpack.c.l.b16 %v254
    %v1070 = vunpack.c.l.b16 %v255
    %v1071 = vunpack.c.l.b16 %v256
    %v1072 = vunpack.c.l.b16 %v257
    %v1073 = vunpack.c.l.b16 %v258
    %v1074 = vunpack.c.l.b16 %v259
    %v1075 = vunpack.c.l.b16 %v260
    %v1076 = vunpack.c.l.b16 %v261
    %v1077 = vunpack.c.l.b16 %v262
    %v1078 = vunpack.c.l.b16 %v263
    %v1079 = vunpack.c.l.b16 %v264
    %v1080 = vunpack.c.l.b16 %v265
    %v1081 = vunpack.c.l.b16 %v266
    %v1082 = vunpack.c.l.b16 %v267
    %v1083 = vunpack.c.l.b16 %v268
    %v1084 = vunpack.c.l.b16 %v269
    %v1085 = vunpack.c.l.b16 %v270
    %v1086 = vunpack.c.l.b16 %v271
    %v1087 = vunpack.c.l.b16 %v272
    %v1088 = vunpack.c.l.b16 %v273
    %v1089 = vunpack.c.l.b16 %v274
    %v1090 = vunpack.c.l.b16 %v275
    %v1091 = vunpack.c.l.b16 %v276
    %v1092 = vunpack.c.l.b16 %v277
    %v1093 = vunpack.c.l.b16 %v278
    %v1094 = vunpack.c.l.b16 %v279
    %v1095 = vunpack.c.l.b16 %v280
    %v1096 = vunpack.c.l.b16 %v281
    %v1097 = vunpack.c.l.b16 %v282
    %v1098 = vunpack.c.l.b16 %v283
    %v1099 = vunpack.c.l.b16 %v284
    %v1100 = vunpack.c.l.b16 %v285
    %v1101 = vunpack.c.l.b16 %v286
    %v1102 = vunpack.c.l.b16 %v287
    %v1103 = vunpack.c.l.b16 %v288
    %v1104 = vunpack.c.l.b16 %v289
    %v1105 = vunpack.c.l.b16 %v290
    %v1106 = vunpack.c.l.b16 %v291
    %v1107 = vunpack.c.l.b16 %v292
    %v1108 = vunpack.c.l.b16 %v293
    %v1109 = vunpack.c.l.b16 %v294
    %v1110 = vunpack.c.l.b16 %v295
    %v1111 = vunpack.c.l.b16 %v296
    %v1112 = vunpack.c.l.b16 %v297
    %v1113 = vunpack.c.l.b16 %v298
    %v1114 = vunpack.c.l.b16 %v299
    %v1115 = vunpack.c.l.b16 %v300
    %v1116 = vunpack.c.l.b16 %v301
    %v1117 = vunpack.c.l.b16 %v302
    %v1118 = vunpack.c.l.b16 %v303
    %v1119 = vunpack.c.l.b16 %v304
    %v1120 = vunpack.c.l.b16 %v305
    %v1121 = vunpack.c.l.b16 %v306
    %v1122 = vunpack.c.l.b16 %v307
    %v1123 = vunpack.c.l.b16 %v308
    %v1124 = vunpack.c.l.b16 %v309
    %v1125 = vunpack.c.l.b16 %v310
    %v1126 = vunpack.c.l.b16 %v311
    %v1127 = vunpack.c.l.b16 %v312
    %v1128 = vunpack.c.l.b16 %v313
    %v1129 = vunpack.c.l.b16 %v314
    %v1130 = vunpack.c.l.b16 %v315
    %v1131 = vunpack.c.l.b16 %v316
    %v1132 = vunpack.c.l.b16 %v317
    %v1133 = vunpack.c.l.b16 %v318
    %v1134 = vunpack.c.l.b16 %v319
    %v1135 = vunpack.c.l.b16 %v320
    %v1136 = vunpack.c.l.b16 %v321
    %v1137 = vunpack.c.l.b16 %v322
    %v1138 = vunpack.c.l.b16 %v323
    %v1139 = vunpack.c.l.b16 %v324
    %v1140 = vunpack.c.l.b16 %v325
    %v1141 = vunpack.c.l.b16 %v326
    %v1142 = vunpack.c.l.b16 %v327
    %v1143 = vunpack.c.l.b16 %v328
    %v1144 = vunpack.c.l.b16 %v329
    %v1145 = vunpack.c.l.b16 %v330
    %v1146 = vunpack.c.l.b16 %v331
    %v1147 = vunpack.c.l.b16 %v332
    %v1148 = vunpack.c.l.b16 %v333
    %v1149 = vunpack.c.l.b16 %v334
    %v1150 = vunpack.c.l.b16 %v335
    %v1151 = vunpack.c.l.b16 %v336
    %v1152 = vunpack.c.l.b16 %v337
    %v1153 = vunpack.c.l.b16 %v338
    %v1154 = vunpack.c.l.b16 %v339
    %v1155 = vunpack.c.l.b16 %v340
    %v1156 = vunpack.c.l.b16 %v341
    %v1157 = vunpack.c.l.b16 %v342
    %v1158 = vunpack.c.l.b16 %v343
    %v1159 = vunpack.c.l.b16 %v344
    %v1160 = vunpack.c.l.b16 %v345
    %v1161 = vunpack.c.l.b16 %v346
    %v1162 = vunpack.c.l.b16 %v347
    %v1163 = vunpack.c.l.b16 %v348
    %v1164 = vunpack.c.l.b16 %v349
    %v1165 = vunpack.c.l.b16 %v350
    %v1166 = vunpack.c.l.b16 %v351
    %v1167 = vunpack.c.l.b16 %v352
    %v1168 = vunpack.c.l.b16 %v353
    %v1169 = vunpack.c.l.b16 %v354
    %v1170 = vunpack.c.l.b16 %v355
    %v1171 = vunpack.c.l.b16 %v356
    %v1172 = vunpack.c.l.b16 %v357
    %v1173 = vunpack.c.l.b16 %v358
    %v1174 = vunpack.c.l.b16 %v359
    %v1175 = vunpack.c.l.b16 %v360
    %v1176 = vunpack.c.l.b16 %v361
    %v1177 = vunpack.c.l.b16 %v362
    %v1178 = vunpack.c.l.b16 %v363
    %v1179 = vunpack.c.l.b16 %v364
    %v1180 = vunpack.c.l.b16 %v365
    %v1181 = vunpack.c.l.b16 %v366
    %v1182 = vunpack.c.l.b16 %v367
    %v1183 = vunpack.c.l.b16 %v368
    %v1184 = vunpack.c.l.b16 %v369
    %v1185 = vunpack.c.l.b16 %v370
    %v1186 = vunpack.c.l.b16 %v371
    %v1187 = vunpack.c.l.b16 %v372
    %v1188 = vunpack.c.l.b16 %v373
    %v1189 = vunpack.c.l.b16 %v374
    %v1190 = vunpack.c.l.b16 %v375
    %v1191 = vunpack.c.l.b16 %v376
    %v1192 = vunpack.c.l.b16 %v377
    %v1193 = vunpack.c.l.b16 %v378
    %v1194 = vunpack.c.l.b16 %v379
    %v1195 = vunpack.c.l.b16 %v380
    %v1196 = vunpack.c.l.b16 %v381
    %v1197 = vunpack.c.l.b16 %v382
    %v1198 = vunpack.c.l.b16 %v383
    %v1199 = vunpack.c.l.b16 %v384
    %v1200 = vunpack.c.l.b16 %v385
    %v1201 = vunpack.c.l.b16 %v386
    %v1202 = vunpack.c.l.b16 %v387
    %v1203 = vunpack.c.l.b16 %v388
    %v1204 = vunpack.c.l.b16 %v389
    %v1205 = vunpack.c.l.b16 %v390
    %v1206 = vunpack.c.l.b16 %v391
    %v1207 = vunpack.c.l.b16 %v392
    %v1208 = vunpack.c.l.b16 %v393
    %v1209 = vunpack.c.l.b16 %v394
    %v1210 = vunpack.c.l.b16 %v395
    %v1211 = vunpack.c.l.b16 %v396
    %v1212 = vunpack.c.l.b16 %v397
    %v1213 = vunpack.c.l.b16 %v398
    %v1214 = vunpack.c.l.b16 %v399
    %v1215 = vunpack.c.l.b16 %v400
    %v1216 = vunpack.c.l.b16 %v401
    %v1217 = vunpack.c.l.b16 %v402
    %v1218 = vunpack.c.l.b16 %v403
    %v1219 = vunpack.c.l.b16 %v404
    %v1220 = vunpack.c.l.b16 %v405
    %v1221 = vunpack.c.l.b16 %v406
    %v1222 = vunpack.c.l.b16 %v407
    %v1223 = vunpack.c.l.b16 %v408
    %v1224 = vunpack.c.l.b16 %v409
    %v1225 = vunpack.c.l.b16 %v410
    %v1226 = vunpack.c.l.b16 %v411
    %v1227 = vunpack.c.l.b16 %v412
    %v1228 = vunpack.c.l.b16 %v413
    %v1229 = vunpack.c.l.b16 %v414
    %v1230 = vunpack.c.l.b16 %v415
    %v1231 = vunpack.c.l.b16 %v416
    %v1232 = vunpack.c.l.b16 %v417
    %v1233 = vunpack.c.l.b16 %v418
    %v1234 = vunpack.c.l.b16 %v419
    %v1235 = vunpack.c.l.b16 %v420
    %v1236 = vunpack.c.l.b16 %v421
    %v1237 = vunpack.c.l.b16 %v422
    %v1238 = vunpack.c.l.b16 %v423
    %v1239 = vunpack.c.l.b16 %v424
    %v1240 = vunpack.c.l.b16 %v425
    %v1241 = vunpack.c.l.b16 %v426
    %v1242 = vunpack.c.l.b16 %v427
    %v1243 = vunpack.c.l.b16 %v428
    %v1244 = vunpack.c.l.b16 %v429
    %v1245 = vunpack.c.l.b16 %v430
    %v1246 = vunpack.c.l.b16 %v431
    %v1247 = vunpack.c.l.b16 %v432
    %v1248 = vunpack.c.l.b16 %v433
    %v1249 = vunpack.c.l.b16 %v434
    %v1250 = vunpack.c.l.b16 %v435
    %v1251 = vunpack.c.l.b16 %v436
    %v1252 = vunpack.c.l.b16 %v437
    %v1253 = vunpack.c.l.b16 %v438
    %v1254 = vunpack.c.l.b16 %v439
    %v1255 = vunpack.c.l.b16 %v440
    %v1256 = vunpack.c.l.b16 %v441
    %v1257 = vunpack.c.l.b16 %v442
    %v1258 = vunpack.c.l.b16 %v443
    %v1259 = vunpack.c.l.b16 %v444
    %v1260 = vunpack.c.l.b16 %v445
    %v1261 = vunpack.c.l.b16 %v446
    %v1262 = vunpack.c.l.b16 %v447
    %v1263 = vunpack.c.l.b16 %v448
    %v1264 = vunpack.c.l.b16 %v449
    %v1265 = vunpack.c.l.b16 %v450
    %v1266 = vunpack.c.l.b16 %v451
    %v1267 = vunpack.c.l.b16 %v452
    %v1268 = vunpack.c.l.b16 %v453
    %v1269 = vunpack.c.l.b16 %v454
    %v1270 = vunpack.c.l.b16 %v455
    %v1271 = vunpack.c.l.b16 %v456
    %v1272 = vunpack.c.l.b16 %v457
    %v1273 = vunpack.c.l.b16 %v458
    %v1274 = vunpack.c.l.b16 %v459
    %v1275 = vunpack.c.l.b16 %v460
    %v1276 = vpack.c.b16 %v983, %v982
    %v1277 = vpack.c.b16 %v985, %v984
    %v1278 = vpack.c.b16 %v987, %v986
    %v1279 = vpack.c.b16 %v989, %v988
    %v1280 = vpack.c.b16 %v991, %v990
    %v1281 = vpack.c.b16 %v993, %v992
    %v1282 = vpack.c.b16 %v995, %v994
    %v1283 = vpack.c.b16 %v997, %v996
    %v1284 = vpack.c.b16 %v999, %v998
    %v1285 = vpack.c.b16 %v1001, %v1000
    %v1286 = vpack.c.b16 %v1003, %v1002
    %v1287 = vpack.c.b16 %v1005, %v1004
    %v1288 = vpack.c.b16 %v1007, %v1006
    %v1289 = vpack.c.b16 %v1009, %v1008
    %v1290 = vpack.c.b16 %v1011, %v1010
    %v1291 = vpack.c.b16 %v1013, %v1012
    %v1292 = vpack.c.b16 %v1015, %v1014
    %v1293 = vpack.c.b16 %v1017, %v1016
    %v1294 = vpack.c.b16 %v1019, %v1018
    %v1295 = vpack.c.b16 %v1021, %v1020
    %v1296 = vpack.c.b16 %v1023, %v1022
    %v1297 = vpack.c.b16 %v1025, %v1024
    %v1298 = vpack.c.b16 %v1027, %v1026
    %v1299 = vpack.c.b16 %v1029, %v1028
    %v1300 = vpack.c.b16 %v1031, %v1030
    %v1301 = vpack.c.b16 %v1033, %v1032
    %v1302 = vpack.c.b16 %v1035, %v1034
    %v1303 = vpack.c.b16 %v1037, %v1036
    %v1304 = vpack.c.b16 %v1039, %v1038
    %v1305 = vpack.c.b16 %v1041, %v1040
    %v1306 = vpack.c.b16 %v1043, %v1042
    %v1307 = vpack.c.b16 %v1045, %v1044
    %v1308 = vpack.c.b16 %v1047, %v1046
    %v1309 = vpack.c.b16 %v1049, %v1048
    %v1310 = vpack.c.b16 %v1051, %v1050
    %v1311 = vpack.c.b16 %v1053, %v1052
    %v1312 = vpack.c.b16 %v1055, %v1054
    %v1313 = vpack.c.b16 %v1057, %v1056
    %v1314 = vpack.c.b16 %v1059, %v1058
    %v1315 = vpack.c.b16 %v1061, %v1060
    %v1316 = vpack.c.b16 %v1063, %v1062
    %v1317 = vpack.c.b16 %v1065, %v1064
    %v1318 = vpack.c.b16 %v1067, %v1066
    %v1319 = vpack.c.b16 %v1069, %v1068
    %v1320 = vpack.c.b16 %v1071, %v1070
    %v1321 = vpack.c.b16 %v1073, %v1072
    %v1322 = vpack.c.b16 %v1075, %v1074
    %v1323 = vpack.c.b16 %v1077, %v1076
    %v1324 = vpack.c.b16 %v1079, %v1078
    %v1325 = vpack.c.b16 %v1081, %v1080
    %v1326 = vpack.c.b16 %v1083, %v1082
    %v1327 = vpack.c.b16 %v1085, %v1084
    %v1328 = vpack.c.b16 %v1087, %v1086
    %v1329 = vpack.c.b16 %v1089, %v1088
    %v1330 = vpack.c.b16 %v1091, %v1090
    %v1331 = vpack.c.b16 %v1093, %v1092
    %v1332 = vpack.c.b16 %v1095, %v1094
    %v1333 = vpack.c.b16 %v1097, %v1096
    %v1334 = vpack.c.b16 %v1099, %v1098
    %v1335 = vpack.c.b16 %v1101, %v1100
    %v1336 = vpack.c.b16 %v1103, %v1102
    %v1337 = vpack.c.b16 %v1105, %v1104
    %v1338 = vpack.c.b16 %v1107, %v1106
    %v1339 = vpack.c.b16 %v1109, %v1108
    %v1340 = vpack.c.b16 %v1111, %v1110
    %v1341 = vpack.c.b16 %v1113, %v1112
    %v1342 = vpack.c.b16 %v1115, %v1114
    %v1343 = vpack.c.b16 %v1117, %v1116
    %v1344 = vpack.c.b16 %v1119, %v1118
    %v1345 = vpack.c.b16 %v1121, %v1120
    %v1346 = vpack.c.b16 %v1123, %v1122
    %v1347 = vpack.c.b16 %v1125, %v1124
    %v1348 = vpack.c.b16 %v1127, %v1126
    %v1349 = vpack.c.b16 %v1129, %v1128
    %v1350 = vpack.c.b16 %v1131, %v1130
    %v1351 = vpack.c.b16 %v1133, %v1132
    %v1352 = vpack.c.b16 %v1135, %v1134
    %v1353 = vpack.c.b16 %v1137, %v1136
    %v1354 = vpack.c.b16 %v1139, %v1138
    %v1355 = vpack.c.b16 %v1141, %v1140
    %v1356 = vpack.c.b16 %v1143, %v1142
    %v1357 = vpack.c.b16 %v1145, %v1144
    %v1358 = vpack.c.b16 %v1147, %v1146
    %v1359 = vpack.c.b16 %v1149, %v1148
    %v1360 = vpack.c.b16 %v1151, %v1150
    %v1361 = vpack.c.b16 %v1153, %v1152
    %v1362 = vpack.c.b16 %v1155, %v1154
    %v1363 = vpack.c.b16 %v1157, %v1156
    %v1364 = vpack.c.b16 %v1159, %v1158
    %v1365 = vpack.c.b16 %v1161, %v1160
    %v1366 = vpack.c.b16 %v1163, %v1162
    %v1367 = vpack.c.b16 %v1165, %v1164
    %v1368 = vpack.c.b16 %v1167, %v1166
    %v1369 = vpack.c.b16 %v1169, %v1168
    %v1370 = vpack.c.b16 %v1171, %v1170
    %v1371 = vpack.c.b16 %v1173, %v1172
    %v1372 = vpack.c.b16 %v1175, %v1174
    %v1373 = vpack.c.b16 %v1177, %v1176
    %v1374 = vpack.c.b16 %v1179, %v1178
    %v1375 = vpack.c.b16 %v1181, %v1180
    %v1376 = vpack.c.b16 %v1183, %v1182
    %v1377 = vpack.c.b16 %v1185, %v1184
    %v1378 = vpack.c.b16 %v1187, %v1186
    %v1379 = vpack.c.b16 %v1189, %v1188
    %v1380 = vpack.c.b16 %v1191, %v1190
    %v1381 = vpack.c.b16 %v1193, %v1192
    %v1382 = vpack.c.b16 %v1195, %v1194
    %v1383 = vpack.c.b16 %v1197, %v1196
    %v1384 = vpack.c.b16 %v1199, %v1198
    %v1385 = vpack.c.b16 %v1201, %v1200
    %v1386 = vpack.c.b16 %v1203, %v1202
    %v1387 = vpack.c.b16 %v1205, %v1204
    %v1388 = vpack.c.b16 %v1207, %v1206
    %v1389 = vpack.c.b16 %v1209, %v1208
    %v1390 = vpack.c.b16 %v1211, %v1210
    %v1391 = vpack.c.b16 %v1213, %v1212
    %v1392 = vpack.c.b16 %v1215, %v1214
    %v1393 = vpack.c.b16 %v1217, %v1216
    %v1394 = vpack.c.b16 %v1219, %v1218
    %v1395 = vpack.c.b16 %v1221, %v1220
    %v1396 = vpack.c.b16 %v1223, %v1222
    %v1397 = vpack.c.b16 %v1225, %v1224
    %v1398 = vpack.c.b16 %v1227, %v1226
    %v1399 = vpack.c.b16 %v1229, %v1228
    %v1400 = vpack.c.b16 %v1231, %v1230
    %v1401 = vpack.c.b16 %v1233, %v1232
    %v1402 = vpack.c.b16 %v1235, %v1234
    %v1403 = vpack.c.b16 %v1237, %v1236
    %v1404 = vpack.c.b16 %v1239, %v1238
    %v1405 = vpack.c.b16 %v1241, %v1240
    %v1406 = vpack.c.b16 %v1243, %v1242
    %v1407 = vpack.c.b16 %v1245, %v1244
    %v1408 = vpack.c.b16 %v1247, %v1246
    %v1409 = vpack.c.b16 %v1249, %v1248
    %v1410 = vpack.c.b16 %v1251, %v1250
    %v1411 = vpack.c.b16 %v1253, %v1252
    %v1412 = vpack.c.b16 %v1255, %v1254
    %v1413 = vpack.c.b16 %v1257, %v1256
    %v1414 = vpack.c.b16 %v1259, %v1258
    %v1415 = vpack.c.b16 %v1261, %v1260
    %v1416 = vpack.c.b16 %v1263, %v1262
    %v1417 = vpack.c.b16 %v1265, %v1264
    %v1418 = vpack.c.b16 %v1267, %v1266
    %v1419 = vpack.c.b16 %v1269, %v1268
    %v1420 = vpack.c.b16 %v1271, %v1270
    %v1421 = vpack.c.b16 %v1273, %v1272
    %v1422 = vpack.c.b16 %v1275, %v1274
    %vm1570 = vcmask 392192
    %v1572 = vsel %vm1570, %v669, 0
    %1574 = vmatpush.bf16.msra.mxu0 %v1283
    %1575 = vmatpush.bf16.msra.mxu0 %v1282
    %1576 = vmatpush.bf16.msra.mxu0 %v1281
    %1577 = vmatpush.bf16.msra.mxu0 %v1280
    %1578 = vmatpush.bf16.msra.mxu0 %v1279
    %1579 = vmatpush.bf16.msra.mxu0 %v1278
    %1580 = vmatpush.bf16.msra.mxu0 %v1277
    %1581 = vmatpush.bf16.msra.mxu0 %v1276
    %1582 = vmatmul.bf16.gmra.mxu0 %v651
    %v1583 = vpop.f32.mrf.mxu0
    %v1584 = vadd.f32 %v619, %v1583
    %v1585 = vpop.f32.mrf.mxu0
    %1586 = vdwg.mxu0
    %1587 = vmatpush.bf16.msra.mxu0 %v1291
    %1588 = vmatpush.bf16.msra.mxu0 %v1290
    %1589 = vmatpush.bf16.msra.mxu0 %v1289
    %1590 = vmatpush.bf16.msra.mxu0 %v1288
    %1591 = vmatpush.bf16.msra.mxu0 %v1287
    %1592 = vmatpush.bf16.msra.mxu0 %v1286
    %1593 = vmatpush.bf16.msra.mxu0 %v1285
    %1594 = vmatpush.bf16.msra.mxu0 %v1284
    %1595 = vmatmul.bf16.gmra.mxu0 %v652
    %v1596 = vpop.f32.mrf.mxu0
    %v1597 = vadd.f32 %v1584, %v1596
    %v1598 = vpop.f32.mrf.mxu0
    %1599 = vdwg.mxu0
    %1600 = vmatpush.bf16.msra.mxu0 %v1299
    %1601 = vmatpush.bf16.msra.mxu0 %v1298
    %1602 = vmatpush.bf16.msra.mxu0 %v1297
    %1603 = vmatpush.bf16.msra.mxu0 %v1296
    %1604 = vmatpush.bf16.msra.mxu0 %v1295
    %1605 = vmatpush.bf16.msra.mxu0 %v1294
    %1606 = vmatpush.bf16.msra.mxu0 %v1293
    %1607 = vmatpush.bf16.msra.mxu0 %v1292
    %1608 = vmatmul.bf16.gmra.mxu0 %v653
    %v1609 = vpop.f32.mrf.mxu0
    %v1610 = vadd.f32 %v1597, %v1609
    %v1611 = vpop.f32.mrf.mxu0
    %1612 = vdwg.mxu0
    %1613 = vmatpush.bf16.msra.mxu0 %v1307
    %1614 = vmatpush.bf16.msra.mxu0 %v1306
    %1615 = vmatpush.bf16.msra.mxu0 %v1305
    %1616 = vmatpush.bf16.msra.mxu0 %v1304
    %1617 = vmatpush.bf16.msra.mxu0 %v1303
    %1618 = vmatpush.bf16.msra.mxu0 %v1302
    %1619 = vmatpush.bf16.msra.mxu0 %v1301
    %1620 = vmatpush.bf16.msra.mxu0 %v1300
    %1621 = vmatmul.bf16.gmra.mxu0 %v654
    %v1622 = vpop.f32.mrf.mxu0
    %v1623 = vadd.f32 %v1610, %v1622
    %v1624 = vpop.f32.mrf.mxu0
    %1625 = vdwg.mxu0
    %1626 = vmatpush.bf16.msra.mxu0 %v1315
    %1627 = vmatpush.bf16.msra.mxu0 %v1314
    %1628 = vmatpush.bf16.msra.mxu0 %v1313
    %1629 = vmatpush.bf16.msra.mxu0 %v1312
    %1630 = vmatpush.bf16.msra.mxu0 %v1311
    %1631 = vmatpush.bf16.msra.mxu0 %v1310
    %1632 = vmatpush.bf16.msra.mxu0 %v1309
    %1633 = vmatpush.bf16.msra.mxu0 %v1308
    %1634 = vmatmul.bf16.gmra.mxu0 %v655
    %v1635 = vpop.f32.mrf.mxu0
    %v1636 = vadd.f32 %v1623, %v1635
    %v1637 = vpop.f32.mrf.mxu0
    %1638 = vdwg.mxu0
    %1639 = vmatpush.bf16.msra.mxu0 %v1323
    %1640 = vmatpush.bf16.msra.mxu0 %v1322
    %1641 = vmatpush.bf16.msra.mxu0 %v1321
    %1642 = vmatpush.bf16.msra.mxu0 %v1320
    %1643 = vmatpush.bf16.msra.mxu0 %v1319
    %1644 = vmatpush.bf16.msra.mxu0 %v1318
    %1645 = vmatpush.bf16.msra.mxu0 %v1317
    %1646 = vmatpush.bf16.msra.mxu0 %v1316
    %1647 = vmatmul.bf16.gmra.mxu0 %v656
    %v1648 = vpop.f32.mrf.mxu0
    %v1649 = vadd.f32 %v1636, %v1648
    %v1650 = vpop.f32.mrf.mxu0
    %1651 = vdwg.mxu0
    %1652 = vmatpush.bf16.msra.mxu0 %v1331
    %1653 = vmatpush.bf16.msra.mxu0 %v1330
    %1654 = vmatpush.bf16.msra.mxu0 %v1329
    %1655 = vmatpush.bf16.msra.mxu0 %v1328
    %1656 = vmatpush.bf16.msra.mxu0 %v1327
    %1657 = vmatpush.bf16.msra.mxu0 %v1326
    %1658 = vmatpush.bf16.msra.mxu0 %v1325
    %1659 = vmatpush.bf16.msra.mxu0 %v1324
    %1660 = vmatmul.bf16.gmra.mxu0 %v657
    %v1661 = vpop.f32.mrf.mxu0
    %v1662 = vadd.f32 %v1649, %v1661
    %v1663 = vpop.f32.mrf.mxu0
    %1664 = vdwg.mxu0
    %1665 = vmatpush.bf16.msra.mxu0 %v1339
    %1666 = vmatpush.bf16.msra.mxu0 %v1338
    %1667 = vmatpush.bf16.msra.mxu0 %v1337
    %1668 = vmatpush.bf16.msra.mxu0 %v1336
    %1669 = vmatpush.bf16.msra.mxu0 %v1335
    %1670 = vmatpush.bf16.msra.mxu0 %v1334
    %1671 = vmatpush.bf16.msra.mxu0 %v1333
    %1672 = vmatpush.bf16.msra.mxu0 %v1332
    %1673 = vmatmul.bf16.gmra.mxu0 %v658
    %v1674 = vpop.f32.mrf.mxu0
    %v1675 = vadd.f32 %v1662, %v1674
    %v1676 = vpop.f32.mrf.mxu0
    %1677 = vdwg.mxu0
    %1678 = vmatpush.bf16.msra.mxu0 %v1347
    %1679 = vmatpush.bf16.msra.mxu0 %v1346
    %1680 = vmatpush.bf16.msra.mxu0 %v1345
    %1681 = vmatpush.bf16.msra.mxu0 %v1344
    %1682 = vmatpush.bf16.msra.mxu0 %v1343
    %1683 = vmatpush.bf16.msra.mxu0 %v1342
    %1684 = vmatpush.bf16.msra.mxu0 %v1341
    %1685 = vmatpush.bf16.msra.mxu0 %v1340
    %1686 = vmatmul.bf16.gmra.mxu0 %v659
    %v1687 = vpop.f32.mrf.mxu0
    %v1688 = vadd.f32 %v1675, %v1687
    %v1689 = vpop.f32.mrf.mxu0
    %1690 = vdwg.mxu0
    %1691 = vmatpush.bf16.msra.mxu0 %v1355
    %1692 = vmatpush.bf16.msra.mxu0 %v1354
    %1693 = vmatpush.bf16.msra.mxu0 %v1353
    %1694 = vmatpush.bf16.msra.mxu0 %v1352
    %1695 = vmatpush.bf16.msra.mxu0 %v1351
    %1696 = vmatpush.bf16.msra.mxu0 %v1350
    %1697 = vmatpush.bf16.msra.mxu0 %v1349
    %1698 = vmatpush.bf16.msra.mxu0 %v1348
    %1699 = vmatmul.bf16.gmra.mxu0 %v660
    %v1700 = vpop.f32.mrf.mxu0
    %v1701 = vadd.f32 %v1688, %v1700
    %v1702 = vpop.f32.mrf.mxu0
    %1703 = vdwg.mxu0
    %1704 = vmatpush.bf16.msra.mxu0 %v1363
    %1705 = vmatpush.bf16.msra.mxu0 %v1362
    %1706 = vmatpush.bf16.msra.mxu0 %v1361
    %1707 = vmatpush.bf16.msra.mxu0 %v1360
    %1708 = vmatpush.bf16.msra.mxu0 %v1359
    %1709 = vmatpush.bf16.msra.mxu0 %v1358
    %1710 = vmatpush.bf16.msra.mxu0 %v1357
    %1711 = vmatpush.bf16.msra.mxu0 %v1356
    %1712 = vmatmul.bf16.gmra.mxu0 %v661
    %v1713 = vpop.f32.mrf.mxu0
    %v1714 = vadd.f32 %v1701, %v1713
    %v1715 = vpop.f32.mrf.mxu0
    %1716 = vdwg.mxu0
    %1717 = vmatpush.bf16.msra.mxu0 %v1371
    %1718 = vmatpush.bf16.msra.mxu0 %v1370
    %1719 = vmatpush.bf16.msra.mxu0 %v1369
    %1720 = vmatpush.bf16.msra.mxu0 %v1368
    %1721 = vmatpush.bf16.msra.mxu0 %v1367
    %1722 = vmatpush.bf16.msra.mxu0 %v1366
    %1723 = vmatpush.bf16.msra.mxu0 %v1365
    %1724 = vmatpush.bf16.msra.mxu0 %v1364
    %1725 = vmatmul.bf16.gmra.mxu0 %v662
    %v1726 = vpop.f32.mrf.mxu0
    %v1727 = vadd.f32 %v1714, %v1726
    %v1728 = vpop.f32.mrf.mxu0
    %1729 = vdwg.mxu0
    %1730 = vmatpush.bf16.msra.mxu0 %v1379
    %1731 = vmatpush.bf16.msra.mxu0 %v1378
    %1732 = vmatpush.bf16.msra.mxu0 %v1377
    %1733 = vmatpush.bf16.msra.mxu0 %v1376
    %1734 = vmatpush.bf16.msra.mxu0 %v1375
    %1735 = vmatpush.bf16.msra.mxu0 %v1374
    %1736 = vmatpush.bf16.msra.mxu0 %v1373
    %1737 = vmatpush.bf16.msra.mxu0 %v1372
    %1738 = vmatmul.bf16.gmra.mxu0 %v663
    %v1739 = vpop.f32.mrf.mxu0
    %v1740 = vadd.f32 %v1727, %v1739
    %v1741 = vpop.f32.mrf.mxu0
    %1742 = vdwg.mxu0
    %1743 = vmatpush.bf16.msra.mxu0 %v1387
    %1744 = vmatpush.bf16.msra.mxu0 %v1386
    %1745 = vmatpush.bf16.msra.mxu0 %v1385
    %1746 = vmatpush.bf16.msra.mxu0 %v1384
    %1747 = vmatpush.bf16.msra.mxu0 %v1383
    %1748 = vmatpush.bf16.msra.mxu0 %v1382
    %1749 = vmatpush.bf16.msra.mxu0 %v1381
    %1750 = vmatpush.bf16.msra.mxu0 %v1380
    %1751 = vmatmul.bf16.gmra.mxu0 %v664
    %v1752 = vpop.f32.mrf.mxu0
    %v1753 = vadd.f32 %v1740, %v1752
    %v1754 = vpop.f32.mrf.mxu0
    %1755 = vdwg.mxu0
    %1756 = vmatpush.bf16.msra.mxu0 %v1395
    %1757 = vmatpush.bf16.msra.mxu0 %v1394
    %1758 = vmatpush.bf16.msra.mxu0 %v1393
    %1759 = vmatpush.bf16.msra.mxu0 %v1392
    %1760 = vmatpush.bf16.msra.mxu0 %v1391
    %1761 = vmatpush.bf16.msra.mxu0 %v1390
    %1762 = vmatpush.bf16.msra.mxu0 %v1389
    %1763 = vmatpush.bf16.msra.mxu0 %v1388
    %1764 = vmatmul.bf16.gmra.mxu0 %v665
    %v1765 = vpop.f32.mrf.mxu0
    %v1766 = vadd.f32 %v1753, %v1765
    %v1767 = vpop.f32.mrf.mxu0
    %1768 = vdwg.mxu0
    %1769 = vmatpush.bf16.msra.mxu0 %v1403
    %1770 = vmatpush.bf16.msra.mxu0 %v1402
    %1771 = vmatpush.bf16.msra.mxu0 %v1401
    %1772 = vmatpush.bf16.msra.mxu0 %v1400
    %1773 = vmatpush.bf16.msra.mxu0 %v1399
    %1774 = vmatpush.bf16.msra.mxu0 %v1398
    %1775 = vmatpush.bf16.msra.mxu0 %v1397
    %1776 = vmatpush.bf16.msra.mxu0 %v1396
    %1777 = vmatmul.bf16.gmra.mxu0 %v666
    %v1778 = vpop.f32.mrf.mxu0
    %v1779 = vadd.f32 %v1766, %v1778
    %v1780 = vpop.f32.mrf.mxu0
    %1781 = vdwg.mxu0
    %1782 = vmatpush.bf16.msra.mxu0 %v1411
    %1783 = vmatpush.bf16.msra.mxu0 %v1410
    %1784 = vmatpush.bf16.msra.mxu0 %v1409
    %1785 = vmatpush.bf16.msra.mxu0 %v1408
    %1786 = vmatpush.bf16.msra.mxu0 %v1407
    %1787 = vmatpush.bf16.msra.mxu0 %v1406
    %1788 = vmatpush.bf16.msra.mxu0 %v1405
    %1789 = vmatpush.bf16.msra.mxu0 %v1404
    %1790 = vmatmul.bf16.gmra.mxu0 %v667
    %v1791 = vpop.f32.mrf.mxu0
    %v1792 = vadd.f32 %v1779, %v1791
    %v1793 = vpop.f32.mrf.mxu0
    %1794 = vdwg.mxu0
    %1795 = vmatpush.bf16.msra.mxu0 %v1419
    %1796 = vmatpush.bf16.msra.mxu0 %v1418
    %1797 = vmatpush.bf16.msra.mxu0 %v1417
    %1798 = vmatpush.bf16.msra.mxu0 %v1416
    %1799 = vmatpush.bf16.msra.mxu0 %v1415
    %1800 = vmatpush.bf16.msra.mxu0 %v1414
    %1801 = vmatpush.bf16.msra.mxu0 %v1413
    %1802 = vmatpush.bf16.msra.mxu0 %v1412
    %1803 = vmatmul.bf16.gmra.mxu0 %v668
    %v1804 = vpop.f32.mrf.mxu0
    %v1805 = vadd.f32 %v1792, %v1804
    %v1806 = vpop.f32.mrf.mxu0
    %1807 = vdwg.mxu0
    %1808 = vmatpush.bf16.msra.mxu0 0
    %1809 = vmatpush.bf16.msra.mxu0 0
    %1810 = vmatpush.bf16.msra.mxu0 0
    %1811 = vmatpush.bf16.msra.mxu0 0
    %1812 = vmatpush.bf16.msra.mxu0 0
    %1813 = vmatpush.bf16.msra.mxu0 %v1422
    %1814 = vmatpush.bf16.msra.mxu0 %v1421
    %1815 = vmatpush.bf16.msra.mxu0 %v1420
    %1816 = vmatmul.bf16.gmra.mxu0 %v1572
    %v1817 = vpop.f32.mrf.mxu0
    %v1818 = vadd.f32 %v1805, %v1817
    %v1819 = vpop.f32.mrf.mxu0
    %1820 = vdwg.mxu0
    %v1821 = vld [vmem:[%s4] sm:$0x1]
    %v1823 = vperm.slane %v1821, 0
    %v1825 = vadd.f32 %v1818, %v1823
    %v1826 = vmax.f32 %v1825, 0.0
    %v1827 = vpack.c.bf16 %v1826, %v1826
    %v1828 = vld [vmem:[#allocation10] sm:$0xf]
    %v1829 = vld [vmem:[#allocation10 + $0x4] sm:$0xf]
    %v1830 = vld [vmem:[#allocation10 + $0x8] sm:$0xf]
    %v1831 = vld [vmem:[#allocation10 + $0xc] sm:$0xf]
    %v1832 = vld [vmem:[#allocation10 + $0x10] sm:$0xf]
    %v1833 = vld [vmem:[#allocation10 + $0x14] sm:$0xf]
    %v1834 = vld [vmem:[#allocation10 + $0x18] sm:$0xf]
    %v1835 = vld [vmem:[#allocation10 + $0x1c] sm:$0xf]
    %v1836 = vld [vmem:[#allocation10 + $0x20] sm:$0xf]
    %v1837 = vld [vmem:[#allocation10 + $0x24] sm:$0xf]
    %v1838 = vld [vmem:[#allocation10 + $0x28] sm:$0xf]
    %v1839 = vld [vmem:[#allocation10 + $0x2c] sm:$0xf]
    %v1840 = vld [vmem:[#allocation10 + $0x30] sm:$0xf]
    %v1841 = vld [vmem:[#allocation10 + $0x34] sm:$0xf]
    %v1842 = vld [vmem:[#allocation10 + $0x38] sm:$0xf]
    %v1843 = vld [vmem:[#allocation10 + $0x3c] sm:$0xf]
    %v1844 = vld [vmem:[#allocation11] sm:$0xf]
    %v1845 = vld [vmem:[#allocation11 + $0x4] sm:$0xf]
    %v1846 = vld [vmem:[#allocation11 + $0x8] sm:$0xf]
    %v1847 = vld [vmem:[#allocation11 + $0xc] sm:$0xf]
    %v1848 = vld [vmem:[#allocation11 + $0x10] sm:$0xf]
    %v1849 = vld [vmem:[#allocation11 + $0x14] sm:$0xf]
    %v1850 = vld [vmem:[#allocation11 + $0x18] sm:$0xf]
    %v1851 = vld [vmem:[#allocation11 + $0x1c] sm:$0xf]
    %v1852 = vld [vmem:[#allocation11 + $0x20] sm:$0xf]
    %v1853 = vld [vmem:[#allocation11 + $0x24] sm:$0xf]
    %v1854 = vld [vmem:[#allocation11 + $0x28] sm:$0xf]
    %v1855 = vld [vmem:[#allocation11 + $0x2c] sm:$0xf]
    %v1856 = vld [vmem:[#allocation11 + $0x30] sm:$0xf]
    %v1857 = vld [vmem:[#allocation11 + $0x34] sm:$0xf]
    %v1858 = vld [vmem:[#allocation11 + $0x38] sm:$0xf]
    %v1859 = vld [vmem:[#allocation11 + $0x3c] sm:$0xf]
    %v1860 = vld [vmem:[#allocation11 + $0x40] sm:$0xf]
    %v1861 = vld [vmem:[#allocation11 + $0x44] sm:$0xf]
    %v1862 = vld [vmem:[#allocation11 + $0x48] sm:$0xf]
    %v1863 = vld [vmem:[#allocation11 + $0x4c] sm:$0xf]
    %v1864 = vld [vmem:[#allocation11 + $0x50] sm:$0xf]
    %v1865 = vld [vmem:[#allocation11 + $0x54] sm:$0xf]
    %v1866 = vld [vmem:[#allocation11 + $0x58] sm:$0xf]
    %v1867 = vld [vmem:[#allocation11 + $0x5c] sm:$0xf]
    %v1868 = vld [vmem:[#allocation11 + $0x60] sm:$0xf]
    %v1869 = vld [vmem:[#allocation11 + $0x64] sm:$0xf]
    %v1870 = vld [vmem:[#allocation11 + $0x68] sm:$0xf]
    %v1871 = vld [vmem:[#allocation11 + $0x6c] sm:$0xf]
    %v1872 = vld [vmem:[#allocation11 + $0x70] sm:$0xf]
    %v1873 = vld [vmem:[#allocation11 + $0x74] sm:$0xf]
    %v1874 = vld [vmem:[#allocation11 + $0x78] sm:$0xf]
    %v1875 = vld [vmem:[#allocation11 + $0x7c] sm:$0xf]
    %v1908 = vunpack.c.l.b16 %v1844
    %v1909 = vunpack.c.l.b16 %v1845
    %v1910 = vunpack.c.l.b16 %v1846
    %v1911 = vunpack.c.l.b16 %v1847
    %v1912 = vunpack.c.l.b16 %v1848
    %v1913 = vunpack.c.l.b16 %v1849
    %v1914 = vunpack.c.l.b16 %v1850
    %v1915 = vunpack.c.l.b16 %v1851
    %v1916 = vunpack.c.l.b16 %v1852
    %v1917 = vunpack.c.l.b16 %v1853
    %v1918 = vunpack.c.l.b16 %v1854
    %v1919 = vunpack.c.l.b16 %v1855
    %v1920 = vunpack.c.l.b16 %v1856
    %v1921 = vunpack.c.l.b16 %v1857
    %v1922 = vunpack.c.l.b16 %v1858
    %v1923 = vunpack.c.l.b16 %v1859
    %v1924 = vunpack.c.l.b16 %v1860
    %v1925 = vunpack.c.l.b16 %v1861
    %v1926 = vunpack.c.l.b16 %v1862
    %v1927 = vunpack.c.l.b16 %v1863
    %v1928 = vunpack.c.l.b16 %v1864
    %v1929 = vunpack.c.l.b16 %v1865
    %v1930 = vunpack.c.l.b16 %v1866
    %v1931 = vunpack.c.l.b16 %v1867
    %v1932 = vunpack.c.l.b16 %v1868
    %v1933 = vunpack.c.l.b16 %v1869
    %v1934 = vunpack.c.l.b16 %v1870
    %v1935 = vunpack.c.l.b16 %v1871
    %v1936 = vunpack.c.l.b16 %v1872
    %v1937 = vunpack.c.l.b16 %v1873
    %v1938 = vunpack.c.l.b16 %v1874
    %v1939 = vunpack.c.l.b16 %v1875
    %v1940 = vpack.c.b16 %v1909, %v1908
    %v1941 = vpack.c.b16 %v1911, %v1910
    %v1942 = vpack.c.b16 %v1913, %v1912
    %v1943 = vpack.c.b16 %v1915, %v1914
    %v1944 = vpack.c.b16 %v1917, %v1916
    %v1945 = vpack.c.b16 %v1919, %v1918
    %v1946 = vpack.c.b16 %v1921, %v1920
    %v1947 = vpack.c.b16 %v1923, %v1922
    %v1948 = vpack.c.b16 %v1925, %v1924
    %v1949 = vpack.c.b16 %v1927, %v1926
    %v1950 = vpack.c.b16 %v1929, %v1928
    %v1951 = vpack.c.b16 %v1931, %v1930
    %v1952 = vpack.c.b16 %v1933, %v1932
    %v1953 = vpack.c.b16 %v1935, %v1934
    %v1954 = vpack.c.b16 %v1937, %v1936
    %v1955 = vpack.c.b16 %v1939, %v1938
    %1972 = vmatpush.bf16.msra.mxu0 %v1947
    %1973 = vmatpush.bf16.msra.mxu0 %v1946
    %1974 = vmatpush.bf16.msra.mxu0 %v1945
    %1975 = vmatpush.bf16.msra.mxu0 %v1944
    %1976 = vmatpush.bf16.msra.mxu0 %v1943
    %1977 = vmatpush.bf16.msra.mxu0 %v1942
    %1978 = vmatpush.bf16.msra.mxu0 %v1941
    %1979 = vmatpush.bf16.msra.mxu0 %v1940
    %1980 = vmatmul.bf16.gmra.mxu0 %v496
    %v1981 = vpop.f32.mrf.mxu0
    %v1982 = vadd.f32 0.0, %v1981
    %v1983 = vpop.f32.mrf.mxu0
    %1984 = vdwg.mxu0
    %1985 = vmatpush.bf16.msra.mxu0 %v1955
    %1986 = vmatpush.bf16.msra.mxu0 %v1954
    %1987 = vmatpush.bf16.msra.mxu0 %v1953
    %1988 = vmatpush.bf16.msra.mxu0 %v1952
    %1989 = vmatpush.bf16.msra.mxu0 %v1951
    %1990 = vmatpush.bf16.msra.mxu0 %v1950
    %1991 = vmatpush.bf16.msra.mxu0 %v1949
    %1992 = vmatpush.bf16.msra.mxu0 %v1948
    %1993 = vmatmul.bf16.gmra.mxu0 %v497
    %v1994 = vpop.f32.mrf.mxu0
    %v1995 = vadd.f32 %v1982, %v1994
    %v1996 = vpop.f32.mrf.mxu0
    %1997 = vdwg.mxu0
    %v2014 = vunpack.c.l.b16 %v1828
    %v2015 = vunpack.c.l.b16 %v1829
    %v2016 = vunpack.c.l.b16 %v1830
    %v2017 = vunpack.c.l.b16 %v1831
    %v2018 = vunpack.c.l.b16 %v1832
    %v2019 = vunpack.c.l.b16 %v1833
    %v2020 = vunpack.c.l.b16 %v1834
    %v2021 = vunpack.c.l.b16 %v1835
    %v2022 = vunpack.c.l.b16 %v1836
    %v2023 = vunpack.c.l.b16 %v1837
    %v2024 = vunpack.c.l.b16 %v1838
    %v2025 = vunpack.c.l.b16 %v1839
    %v2026 = vunpack.c.l.b16 %v1840
    %v2027 = vunpack.c.l.b16 %v1841
    %v2028 = vunpack.c.l.b16 %v1842
    %v2029 = vunpack.c.l.b16 %v1843
    %v2030 = vpack.c.b16 %v2015, %v2014
    %v2031 = vpack.c.b16 %v2017, %v2016
    %v2032 = vpack.c.b16 %v2019, %v2018
    %v2033 = vpack.c.b16 %v2021, %v2020
    %v2034 = vpack.c.b16 %v2023, %v2022
    %v2035 = vpack.c.b16 %v2025, %v2024
    %v2036 = vpack.c.b16 %v2027, %v2026
    %v2037 = vpack.c.b16 %v2029, %v2028
    %2046 = vmatpush.bf16.msra.mxu0 %v2037
    %2047 = vmatpush.bf16.msra.mxu0 %v2036
    %2048 = vmatpush.bf16.msra.mxu0 %v2035
    %2049 = vmatpush.bf16.msra.mxu0 %v2034
    %2050 = vmatpush.bf16.msra.mxu0 %v2033
    %2051 = vmatpush.bf16.msra.mxu0 %v2032
    %2052 = vmatpush.bf16.msra.mxu0 %v2031
    %2053 = vmatpush.bf16.msra.mxu0 %v2030
    %2054 = vmatmul.bf16.gmra.mxu0 %v1827
    %v2055 = vpop.f32.mrf.mxu0
    %v2056 = vadd.f32 %v1995, %v2055
    %v2057 = vpop.f32.mrf.mxu0
    %2058 = vdwg.mxu0
    %v2059 = vld [vmem:[%s7] sm:$0x1]
    %v2061 = vperm.slane %v2059, 0
    %v2063 = vadd.f32 %v2056, %v2061
    %v2064 = vmax.f32 %v2063, 0.0
    %v2065 = vpack.c.bf16 %v2064, %v2064
    %v2066 = vld [vmem:[#allocation13] sm:$0xff]
    %v2067 = vld [vmem:[#allocation13 + $0x8] sm:$0xff]
    %v2068 = vld [vmem:[#allocation13 + $0x10] sm:$0xff]
    %v2069 = vld [vmem:[#allocation13 + $0x18] sm:$0xff]
    %v2070 = vld [vmem:[#allocation13 + $0x20] sm:$0xff]
    %v2071 = vld [vmem:[#allocation13 + $0x28] sm:$0xff]
    %v2072 = vld [vmem:[#allocation13 + $0x30] sm:$0xff]
    %v2073 = vld [vmem:[#allocation13 + $0x38] sm:$0xff]
    %v2074 = vld [vmem:[#allocation13 + $0x40] sm:$0xff]
    %v2075 = vld [vmem:[#allocation13 + $0x48] sm:$0xf]
    %v2076 = vld [vmem:[#allocation13 + $0x4c] sm:$0xff]
    %v2077 = vld [vmem:[#allocation13 + $0x54] sm:$0xff]
    %v2078 = vld [vmem:[#allocation13 + $0x5c] sm:$0xff]
    %v2079 = vld [vmem:[#allocation13 + $0x64] sm:$0xff]
    %v2080 = vld [vmem:[#allocation13 + $0x6c] sm:$0xff]
    %v2081 = vld [vmem:[#allocation13 + $0x74] sm:$0xff]
    %v2082 = vld [vmem:[#allocation13 + $0x7c] sm:$0xff]
    %v2083 = vld [vmem:[#allocation13 + $0x84] sm:$0xff]
    %v2084 = vld [vmem:[#allocation13 + $0x8c] sm:$0xff]
    %v2085 = vld [vmem:[#allocation13 + $0x94] sm:$0xf]
    %v2086 = vld [vmem:[#allocation13 + $0x98] sm:$0xff]
    %v2087 = vld [vmem:[#allocation13 + $0xa0] sm:$0xff]
    %v2088 = vld [vmem:[#allocation13 + $0xa8] sm:$0xff]
    %v2089 = vld [vmem:[#allocation13 + $0xb0] sm:$0xff]
    %v2090 = vld [vmem:[#allocation13 + $0xb8] sm:$0xff]
    %v2091 = vld [vmem:[#allocation13 + $0xc0] sm:$0xff]
    %v2092 = vld [vmem:[#allocation13 + $0xc8] sm:$0xff]
    %v2093 = vld [vmem:[#allocation13 + $0xd0] sm:$0xff]
    %v2094 = vld [vmem:[#allocation13 + $0xd8] sm:$0xff]
    %v2095 = vld [vmem:[#allocation13 + $0xe0] sm:$0xf]
    %v2096 = vld [vmem:[#allocation13 + $0xe4] sm:$0xff]
    %v2097 = vld [vmem:[#allocation13 + $0xec] sm:$0xff]
    %v2098 = vld [vmem:[#allocation13 + $0xf4] sm:$0xff]
    %v2099 = vld [vmem:[#allocation13 + $0xfc] sm:$0xff]
    %v2100 = vld [vmem:[#allocation13 + $0x104] sm:$0xff]
    %v2101 = vld [vmem:[#allocation13 + $0x10c] sm:$0xff]
    %v2102 = vld [vmem:[#allocation13 + $0x114] sm:$0xff]
    %v2103 = vld [vmem:[#allocation13 + $0x11c] sm:$0xff]
    %v2104 = vld [vmem:[#allocation13 + $0x124] sm:$0xff]
    %v2105 = vld [vmem:[#allocation13 + $0x12c] sm:$0xf]
    %v2106 = vld [vmem:[#allocation13 + $0x130] sm:$0xff]
    %v2107 = vld [vmem:[#allocation13 + $0x138] sm:$0xff]
    %v2108 = vld [vmem:[#allocation13 + $0x140] sm:$0xff]
    %v2109 = vld [vmem:[#allocation13 + $0x148] sm:$0xff]
    %v2110 = vld [vmem:[#allocation13 + $0x150] sm:$0xff]
    %v2111 = vld [vmem:[#allocation13 + $0x158] sm:$0xff]
    %v2112 = vld [vmem:[#allocation13 + $0x160] sm:$0xff]
    %v2113 = vld [vmem:[#allocation13 + $0x168] sm:$0xff]
    %v2114 = vld [vmem:[#allocation13 + $0x170] sm:$0xff]
    %v2115 = vld [vmem:[#allocation13 + $0x178] sm:$0xf]
    %v2116 = vld [vmem:[#allocation13 + $0x17c] sm:$0xff]
    %v2117 = vld [vmem:[#allocation13 + $0x184] sm:$0xff]
    %v2118 = vld [vmem:[#allocation13 + $0x18c] sm:$0xff]
    %v2119 = vld [vmem:[#allocation13 + $0x194] sm:$0xff]
    %v2120 = vld [vmem:[#allocation13 + $0x19c] sm:$0xff]
    %v2121 = vld [vmem:[#allocation13 + $0x1a4] sm:$0xff]
    %v2122 = vld [vmem:[#allocation13 + $0x1ac] sm:$0xff]
    %v2123 = vld [vmem:[#allocation13 + $0x1b4] sm:$0xff]
    %v2124 = vld [vmem:[#allocation13 + $0x1bc] sm:$0xff]
    %v2125 = vld [vmem:[#allocation13 + $0x1c4] sm:$0xf]
    %v2126 = vld [vmem:[#allocation13 + $0x1c8] sm:$0xff]
    %v2127 = vld [vmem:[#allocation13 + $0x1d0] sm:$0xff]
    %v2128 = vld [vmem:[#allocation13 + $0x1d8] sm:$0xff]
    %v2129 = vld [vmem:[#allocation13 + $0x1e0] sm:$0xff]
    %v2130 = vld [vmem:[#allocation13 + $0x1e8] sm:$0xff]
    %v2131 = vld [vmem:[#allocation13 + $0x1f0] sm:$0xff]
    %v2132 = vld [vmem:[#allocation13 + $0x1f8] sm:$0xff]
    %v2133 = vld [vmem:[#allocation13 + $0x200] sm:$0xff]
    %v2134 = vld [vmem:[#allocation13 + $0x208] sm:$0xff]
    %v2135 = vld [vmem:[#allocation13 + $0x210] sm:$0xf]
    %v2136 = vld [vmem:[#allocation13 + $0x214] sm:$0xff]
    %v2137 = vld [vmem:[#allocation13 + $0x21c] sm:$0xff]
    %v2138 = vld [vmem:[#allocation13 + $0x224] sm:$0xff]
    %v2139 = vld [vmem:[#allocation13 + $0x22c] sm:$0xff]
    %v2140 = vld [vmem:[#allocation13 + $0x234] sm:$0xff]
    %v2141 = vld [vmem:[#allocation13 + $0x23c] sm:$0xff]
    %v2142 = vld [vmem:[#allocation13 + $0x244] sm:$0xff]
    %v2143 = vld [vmem:[#allocation13 + $0x24c] sm:$0xff]
    %v2144 = vld [vmem:[#allocation13 + $0x254] sm:$0xff]
    %v2145 = vld [vmem:[#allocation13 + $0x25c] sm:$0xf]
    %v2146 = vld [vmem:[#allocation13 + $0x260] sm:$0xff]
    %v2147 = vld [vmem:[#allocation13 + $0x268] sm:$0xff]
    %v2148 = vld [vmem:[#allocation13 + $0x270] sm:$0xff]
    %v2149 = vld [vmem:[#allocation13 + $0x278] sm:$0xff]
    %v2150 = vld [vmem:[#allocation13 + $0x280] sm:$0xff]
    %v2151 = vld [vmem:[#allocation13 + $0x288] sm:$0xff]
    %v2152 = vld [vmem:[#allocation13 + $0x290] sm:$0xff]
    %v2153 = vld [vmem:[#allocation13 + $0x298] sm:$0xff]
    %v2154 = vld [vmem:[#allocation13 + $0x2a0] sm:$0xff]
    %v2155 = vld [vmem:[#allocation13 + $0x2a8] sm:$0xf]
    %v2156 = vld [vmem:[#allocation13 + $0x2ac] sm:$0xff]
    %v2157 = vld [vmem:[#allocation13 + $0x2b4] sm:$0xff]
    %v2158 = vld [vmem:[#allocation13 + $0x2bc] sm:$0xff]
    %v2159 = vld [vmem:[#allocation13 + $0x2c4] sm:$0xff]
    %v2160 = vld [vmem:[#allocation13 + $0x2cc] sm:$0xff]
    %v2161 = vld [vmem:[#allocation13 + $0x2d4] sm:$0xff]
    %v2162 = vld [vmem:[#allocation13 + $0x2dc] sm:$0xff]
    %v2163 = vld [vmem:[#allocation13 + $0x2e4] sm:$0xff]
    %v2164 = vld [vmem:[#allocation13 + $0x2ec] sm:$0xff]
    %v2165 = vld [vmem:[#allocation13 + $0x2f4] sm:$0xf]
    %v2166 = vld [vmem:[#allocation13 + $0x2f8] sm:$0xff]
    %v2167 = vld [vmem:[#allocation13 + $0x300] sm:$0xff]
    %v2168 = vld [vmem:[#allocation13 + $0x308] sm:$0xff]
    %v2169 = vld [vmem:[#allocation13 + $0x310] sm:$0xff]
    %v2170 = vld [vmem:[#allocation13 + $0x318] sm:$0xff]
    %v2171 = vld [vmem:[#allocation13 + $0x320] sm:$0xff]
    %v2172 = vld [vmem:[#allocation13 + $0x328] sm:$0xff]
    %v2173 = vld [vmem:[#allocation13 + $0x330] sm:$0xff]
    %v2174 = vld [vmem:[#allocation13 + $0x338] sm:$0xff]
    %v2175 = vld [vmem:[#allocation13 + $0x340] sm:$0xf]
    %v2176 = vld [vmem:[#allocation13 + $0x344] sm:$0xff]
    %v2177 = vld [vmem:[#allocation13 + $0x34c] sm:$0xff]
    %v2178 = vld [vmem:[#allocation13 + $0x354] sm:$0xff]
    %v2179 = vld [vmem:[#allocation13 + $0x35c] sm:$0xff]
    %v2180 = vld [vmem:[#allocation13 + $0x364] sm:$0xff]
    %v2181 = vld [vmem:[#allocation13 + $0x36c] sm:$0xff]
    %v2182 = vld [vmem:[#allocation13 + $0x374] sm:$0xff]
    %v2183 = vld [vmem:[#allocation13 + $0x37c] sm:$0xff]
    %v2184 = vld [vmem:[#allocation13 + $0x384] sm:$0xff]
    %v2185 = vld [vmem:[#allocation13 + $0x38c] sm:$0xf]
    %v2186 = vld [vmem:[#allocation13 + $0x390] sm:$0xff]
    %v2187 = vld [vmem:[#allocation13 + $0x398] sm:$0xff]
    %v2188 = vld [vmem:[#allocation13 + $0x3a0] sm:$0xff]
    %v2189 = vld [vmem:[#allocation13 + $0x3a8] sm:$0xff]
    %v2190 = vld [vmem:[#allocation13 + $0x3b0] sm:$0xff]
    %v2191 = vld [vmem:[#allocation13 + $0x3b8] sm:$0xff]
    %v2192 = vld [vmem:[#allocation13 + $0x3c0] sm:$0xff]
    %v2193 = vld [vmem:[#allocation13 + $0x3c8] sm:$0xff]
    %v2194 = vld [vmem:[#allocation13 + $0x3d0] sm:$0xff]
    %v2195 = vld [vmem:[#allocation13 + $0x3d8] sm:$0xf]
    %v2196 = vld [vmem:[#allocation13 + $0x3dc] sm:$0xff]
    %v2197 = vld [vmem:[#allocation13 + $0x3e4] sm:$0xff]
    %v2198 = vld [vmem:[#allocation13 + $0x3ec] sm:$0xff]
    %v2199 = vld [vmem:[#allocation13 + $0x3f4] sm:$0xff]
    %v2200 = vld [vmem:[#allocation13 + $0x3fc] sm:$0xff]
    %v2201 = vld [vmem:[#allocation13 + $0x404] sm:$0xff]
    %v2202 = vld [vmem:[#allocation13 + $0x40c] sm:$0xff]
    %v2203 = vld [vmem:[#allocation13 + $0x414] sm:$0xff]
    %v2204 = vld [vmem:[#allocation13 + $0x41c] sm:$0xff]
    %v2205 = vld [vmem:[#allocation13 + $0x424] sm:$0xf]
    %v2206 = vld [vmem:[#allocation13 + $0x428] sm:$0xff]
    %v2207 = vld [vmem:[#allocation13 + $0x430] sm:$0xff]
    %v2208 = vld [vmem:[#allocation13 + $0x438] sm:$0xff]
    %v2209 = vld [vmem:[#allocation13 + $0x440] sm:$0xff]
    %v2210 = vld [vmem:[#allocation13 + $0x448] sm:$0xff]
    %v2211 = vld [vmem:[#allocation13 + $0x450] sm:$0xff]
    %v2212 = vld [vmem:[#allocation13 + $0x458] sm:$0xff]
    %v2213 = vld [vmem:[#allocation13 + $0x460] sm:$0xff]
    %v2214 = vld [vmem:[#allocation13 + $0x468] sm:$0xff]
    %v2215 = vld [vmem:[#allocation13 + $0x470] sm:$0xf]
    %v2216 = vld [vmem:[#allocation13 + $0x474] sm:$0xff]
    %v2217 = vld [vmem:[#allocation13 + $0x47c] sm:$0xff]
    %v2218 = vld [vmem:[#allocation13 + $0x484] sm:$0xff]
    %v2219 = vld [vmem:[#allocation13 + $0x48c] sm:$0xff]
    %v2220 = vld [vmem:[#allocation13 + $0x494] sm:$0xff]
    %v2221 = vld [vmem:[#allocation13 + $0x49c] sm:$0xff]
    %v2222 = vld [vmem:[#allocation13 + $0x4a4] sm:$0xff]
    %v2223 = vld [vmem:[#allocation13 + $0x4ac] sm:$0xff]
    %v2224 = vld [vmem:[#allocation13 + $0x4b4] sm:$0xff]
    %v2225 = vld [vmem:[#allocation13 + $0x4bc] sm:$0xf]
    %v2226 = vld [vmem:[#allocation14] sm:$0xff]
    %v2227 = vld [vmem:[#allocation14 + $0x8] sm:$0xff]
    %v2228 = vld [vmem:[#allocation14 + $0x10] sm:$0x7]
    %v2232 = vperm.slane %v2226, 0
    %v2233 = vperm.slane %v2226, 1
    %v2234 = vperm.slane %v2226, 2
    %v2235 = vperm.slane %v2226, 3
    %v2236 = vperm.slane %v2226, 4
    %v2237 = vperm.slane %v2226, 5
    %v2238 = vperm.slane %v2226, 6
    %v2239 = vperm.slane %v2226, 7
    %v2240 = vperm.slane %v2227, 0
    %v2241 = vperm.slane %v2227, 1
    %v2242 = vperm.slane %v2227, 2
    %v2243 = vperm.slane %v2227, 3
    %v2244 = vperm.slane %v2227, 4
    %v2245 = vperm.slane %v2227, 5
    %v2246 = vperm.slane %v2227, 6
    %v2247 = vperm.slane %v2227, 7
    %v2248 = vperm.slane %v2228, 0
    %v2249 = vperm.slane %v2228, 1
    %v2250 = vperm.slane %v2228, 2
    %v2430 = vunpack.c.l.b16 %v2066
    %v2431 = vunpack.c.h.b16 %v2066
    %v2432 = vunpack.c.l.b16 %v2067
    %v2433 = vunpack.c.h.b16 %v2067
    %v2434 = vunpack.c.l.b16 %v2068
    %v2435 = vunpack.c.h.b16 %v2068
    %v2436 = vunpack.c.l.b16 %v2069
    %v2437 = vunpack.c.h.b16 %v2069
    %v2438 = vunpack.c.l.b16 %v2070
    %v2439 = vunpack.c.h.b16 %v2070
    %v2440 = vunpack.c.l.b16 %v2071
    %v2441 = vunpack.c.h.b16 %v2071
    %v2442 = vunpack.c.l.b16 %v2072
    %v2443 = vunpack.c.h.b16 %v2072
    %v2444 = vunpack.c.l.b16 %v2073
    %v2445 = vunpack.c.h.b16 %v2073
    %v2446 = vunpack.c.l.b16 %v2074
    %v2447 = vunpack.c.h.b16 %v2074
    %v2448 = vunpack.c.l.b16 %v2075
    %v2449 = vunpack.c.l.b16 %v2076
    %v2450 = vunpack.c.h.b16 %v2076
    %v2451 = vunpack.c.l.b16 %v2077
    %v2452 = vunpack.c.h.b16 %v2077
    %v2453 = vunpack.c.l.b16 %v2078
    %v2454 = vunpack.c.h.b16 %v2078
    %v2455 = vunpack.c.l.b16 %v2079
    %v2456 = vunpack.c.h.b16 %v2079
    %v2457 = vunpack.c.l.b16 %v2080
    %v2458 = vunpack.c.h.b16 %v2080
    %v2459 = vunpack.c.l.b16 %v2081
    %v2460 = vunpack.c.h.b16 %v2081
    %v2461 = vunpack.c.l.b16 %v2082
    %v2462 = vunpack.c.h.b16 %v2082
    %v2463 = vunpack.c.l.b16 %v2083
    %v2464 = vunpack.c.h.b16 %v2083
    %v2465 = vunpack.c.l.b16 %v2084
    %v2466 = vunpack.c.h.b16 %v2084
    %v2467 = vunpack.c.l.b16 %v2085
    %v2468 = vunpack.c.l.b16 %v2086
    %v2469 = vunpack.c.h.b16 %v2086
    %v2470 = vunpack.c.l.b16 %v2087
    %v2471 = vunpack.c.h.b16 %v2087
    %v2472 = vunpack.c.l.b16 %v2088
    %v2473 = vunpack.c.h.b16 %v2088
    %v2474 = vunpack.c.l.b16 %v2089
    %v2475 = vunpack.c.h.b16 %v2089
    %v2476 = vunpack.c.l.b16 %v2090
    %v2477 = vunpack.c.h.b16 %v2090
    %v2478 = vunpack.c.l.b16 %v2091
    %v2479 = vunpack.c.h.b16 %v2091
    %v2480 = vunpack.c.l.b16 %v2092
    %v2481 = vunpack.c.h.b16 %v2092
    %v2482 = vunpack.c.l.b16 %v2093
    %v2483 = vunpack.c.h.b16 %v2093
    %v2484 = vunpack.c.l.b16 %v2094
    %v2485 = vunpack.c.h.b16 %v2094
    %v2486 = vunpack.c.l.b16 %v2095
    %v2487 = vunpack.c.l.b16 %v2096
    %v2488 = vunpack.c.h.b16 %v2096
    %v2489 = vunpack.c.l.b16 %v2097
    %v2490 = vunpack.c.h.b16 %v2097
    %v2491 = vunpack.c.l.b16 %v2098
    %v2492 = vunpack.c.h.b16 %v2098
    %v2493 = vunpack.c.l.b16 %v2099
    %v2494 = vunpack.c.h.b16 %v2099
    %v2495 = vunpack.c.l.b16 %v2100
    %v2496 = vunpack.c.h.b16 %v2100
    %v2497 = vunpack.c.l.b16 %v2101
    %v2498 = vunpack.c.h.b16 %v2101
    %v2499 = vunpack.c.l.b16 %v2102
    %v2500 = vunpack.c.h.b16 %v2102
    %v2501 = vunpack.c.l.b16 %v2103
    %v2502 = vunpack.c.h.b16 %v2103
    %v2503 = vunpack.c.l.b16 %v2104
    %v2504 = vunpack.c.h.b16 %v2104
    %v2505 = vunpack.c.l.b16 %v2105
    %v2506 = vunpack.c.l.b16 %v2106
    %v2507 = vunpack.c.h.b16 %v2106
    %v2508 = vunpack.c.l.b16 %v2107
    %v2509 = vunpack.c.h.b16 %v2107
    %v2510 = vunpack.c.l.b16 %v2108
    %v2511 = vunpack.c.h.b16 %v2108
    %v2512 = vunpack.c.l.b16 %v2109
    %v2513 = vunpack.c.h.b16 %v2109
    %v2514 = vunpack.c.l.b16 %v2110
    %v2515 = vunpack.c.h.b16 %v2110
    %v2516 = vunpack.c.l.b16 %v2111
    %v2517 = vunpack.c.h.b16 %v2111
    %v2518 = vunpack.c.l.b16 %v2112
    %v2519 = vunpack.c.h.b16 %v2112
    %v2520 = vunpack.c.l.b16 %v2113
    %v2521 = vunpack.c.h.b16 %v2113
    %v2522 = vunpack.c.l.b16 %v2114
    %v2523 = vunpack.c.h.b16 %v2114
    %v2524 = vunpack.c.l.b16 %v2115
    %v2525 = vunpack.c.l.b16 %v2116
    %v2526 = vunpack.c.h.b16 %v2116
    %v2527 = vunpack.c.l.b16 %v2117
    %v2528 = vunpack.c.h.b16 %v2117
    %v2529 = vunpack.c.l.b16 %v2118
    %v2530 = vunpack.c.h.b16 %v2118
    %v2531 = vunpack.c.l.b16 %v2119
    %v2532 = vunpack.c.h.b16 %v2119
    %v2533 = vunpack.c.l.b16 %v2120
    %v2534 = vunpack.c.h.b16 %v2120
    %v2535 = vunpack.c.l.b16 %v2121
    %v2536 = vunpack.c.h.b16 %v2121
    %v2537 = vunpack.c.l.b16 %v2122
    %v2538 = vunpack.c.h.b16 %v2122
    %v2539 = vunpack.c.l.b16 %v2123
    %v2540 = vunpack.c.h.b16 %v2123
    %v2541 = vunpack.c.l.b16 %v2124
    %v2542 = vunpack.c.h.b16 %v2124
    %v2543 = vunpack.c.l.b16 %v2125
    %v2544 = vunpack.c.l.b16 %v2126
    %v2545 = vunpack.c.h.b16 %v2126
    %v2546 = vunpack.c.l.b16 %v2127
    %v2547 = vunpack.c.h.b16 %v2127
    %v2548 = vunpack.c.l.b16 %v2128
    %v2549 = vunpack.c.h.b16 %v2128
    %v2550 = vunpack.c.l.b16 %v2129
    %v2551 = vunpack.c.h.b16 %v2129
    %v2552 = vunpack.c.l.b16 %v2130
    %v2553 = vunpack.c.h.b16 %v2130
    %v2554 = vunpack.c.l.b16 %v2131
    %v2555 = vunpack.c.h.b16 %v2131
    %v2556 = vunpack.c.l.b16 %v2132
    %v2557 = vunpack.c.h.b16 %v2132
    %v2558 = vunpack.c.l.b16 %v2133
    %v2559 = vunpack.c.h.b16 %v2133
    %v2560 = vunpack.c.l.b16 %v2134
    %v2561 = vunpack.c.h.b16 %v2134
    %v2562 = vunpack.c.l.b16 %v2135
    %v2563 = vunpack.c.l.b16 %v2136
    %v2564 = vunpack.c.h.b16 %v2136
    %v2565 = vunpack.c.l.b16 %v2137
    %v2566 = vunpack.c.h.b16 %v2137
    %v2567 = vunpack.c.l.b16 %v2138
    %v2568 = vunpack.c.h.b16 %v2138
    %v2569 = vunpack.c.l.b16 %v2139
    %v2570 = vunpack.c.h.b16 %v2139
    %v2571 = vunpack.c.l.b16 %v2140
    %v2572 = vunpack.c.h.b16 %v2140
    %v2573 = vunpack.c.l.b16 %v2141
    %v2574 = vunpack.c.h.b16 %v2141
    %v2575 = vunpack.c.l.b16 %v2142
    %v2576 = vunpack.c.h.b16 %v2142
    %v2577 = vunpack.c.l.b16 %v2143
    %v2578 = vunpack.c.h.b16 %v2143
    %v2579 = vunpack.c.l.b16 %v2144
    %v2580 = vunpack.c.h.b16 %v2144
    %v2581 = vunpack.c.l.b16 %v2145
    %v2582 = vunpack.c.l.b16 %v2146
    %v2583 = vunpack.c.h.b16 %v2146
    %v2584 = vunpack.c.l.b16 %v2147
    %v2585 = vunpack.c.h.b16 %v2147
    %v2586 = vunpack.c.l.b16 %v2148
    %v2587 = vunpack.c.h.b16 %v2148
    %v2588 = vunpack.c.l.b16 %v2149
    %v2589 = vunpack.c.h.b16 %v2149
    %v2590 = vunpack.c.l.b16 %v2150
    %v2591 = vunpack.c.h.b16 %v2150
    %v2592 = vunpack.c.l.b16 %v2151
    %v2593 = vunpack.c.h.b16 %v2151
    %v2594 = vunpack.c.l.b16 %v2152
    %v2595 = vunpack.c.h.b16 %v2152
    %v2596 = vunpack.c.l.b16 %v2153
    %v2597 = vunpack.c.h.b16 %v2153
    %v2598 = vunpack.c.l.b16 %v2154
    %v2599 = vunpack.c.h.b16 %v2154
    %v2600 = vunpack.c.l.b16 %v2155
    %v2601 = vunpack.c.l.b16 %v2156
    %v2602 = vunpack.c.h.b16 %v2156
    %v2603 = vunpack.c.l.b16 %v2157
    %v2604 = vunpack.c.h.b16 %v2157
    %v2605 = vunpack.c.l.b16 %v2158
    %v2606 = vunpack.c.h.b16 %v2158
    %v2607 = vunpack.c.l.b16 %v2159
    %v2608 = vunpack.c.h.b16 %v2159
    %v2609 = vunpack.c.l.b16 %v2160
    %v2610 = vunpack.c.h.b16 %v2160
    %v2611 = vunpack.c.l.b16 %v2161
    %v2612 = vunpack.c.h.b16 %v2161
    %v2613 = vunpack.c.l.b16 %v2162
    %v2614 = vunpack.c.h.b16 %v2162
    %v2615 = vunpack.c.l.b16 %v2163
    %v2616 = vunpack.c.h.b16 %v2163
    %v2617 = vunpack.c.l.b16 %v2164
    %v2618 = vunpack.c.h.b16 %v2164
    %v2619 = vunpack.c.l.b16 %v2165
    %v2620 = vunpack.c.l.b16 %v2166
    %v2621 = vunpack.c.h.b16 %v2166
    %v2622 = vunpack.c.l.b16 %v2167
    %v2623 = vunpack.c.h.b16 %v2167
    %v2624 = vunpack.c.l.b16 %v2168
    %v2625 = vunpack.c.h.b16 %v2168
    %v2626 = vunpack.c.l.b16 %v2169
    %v2627 = vunpack.c.h.b16 %v2169
    %v2628 = vunpack.c.l.b16 %v2170
    %v2629 = vunpack.c.h.b16 %v2170
    %v2630 = vunpack.c.l.b16 %v2171
    %v2631 = vunpack.c.h.b16 %v2171
    %v2632 = vunpack.c.l.b16 %v2172
    %v2633 = vunpack.c.h.b16 %v2172
    %v2634 = vunpack.c.l.b16 %v2173
    %v2635 = vunpack.c.h.b16 %v2173
    %v2636 = vunpack.c.l.b16 %v2174
    %v2637 = vunpack.c.h.b16 %v2174
    %v2638 = vunpack.c.l.b16 %v2175
    %v2639 = vunpack.c.l.b16 %v2176
    %v2640 = vunpack.c.h.b16 %v2176
    %v2641 = vunpack.c.l.b16 %v2177
    %v2642 = vunpack.c.h.b16 %v2177
    %v2643 = vunpack.c.l.b16 %v2178
    %v2644 = vunpack.c.h.b16 %v2178
    %v2645 = vunpack.c.l.b16 %v2179
    %v2646 = vunpack.c.h.b16 %v2179
    %v2647 = vunpack.c.l.b16 %v2180
    %v2648 = vunpack.c.h.b16 %v2180
    %v2649 = vunpack.c.l.b16 %v2181
    %v2650 = vunpack.c.h.b16 %v2181
    %v2651 = vunpack.c.l.b16 %v2182
    %v2652 = vunpack.c.h.b16 %v2182
    %v2653 = vunpack.c.l.b16 %v2183
    %v2654 = vunpack.c.h.b16 %v2183
    %v2655 = vunpack.c.l.b16 %v2184
    %v2656 = vunpack.c.h.b16 %v2184
    %v2657 = vunpack.c.l.b16 %v2185
    %v2658 = vunpack.c.l.b16 %v2186
    %v2659 = vunpack.c.h.b16 %v2186
    %v2660 = vunpack.c.l.b16 %v2187
    %v2661 = vunpack.c.h.b16 %v2187
    %v2662 = vunpack.c.l.b16 %v2188
    %v2663 = vunpack.c.h.b16 %v2188
    %v2664 = vunpack.c.l.b16 %v2189
    %v2665 = vunpack.c.h.b16 %v2189
    %v2666 = vunpack.c.l.b16 %v2190
    %v2667 = vunpack.c.h.b16 %v2190
    %v2668 = vunpack.c.l.b16 %v2191
    %v2669 = vunpack.c.h.b16 %v2191
    %v2670 = vunpack.c.l.b16 %v2192
    %v2671 = vunpack.c.h.b16 %v2192
    %v2672 = vunpack.c.l.b16 %v2193
    %v2673 = vunpack.c.h.b16 %v2193
    %v2674 = vunpack.c.l.b16 %v2194
    %v2675 = vunpack.c.h.b16 %v2194
    %v2676 = vunpack.c.l.b16 %v2195
    %v2677 = vunpack.c.l.b16 %v2196
    %v2678 = vunpack.c.h.b16 %v2196
    %v2679 = vunpack.c.l.b16 %v2197
    %v2680 = vunpack.c.h.b16 %v2197
    %v2681 = vunpack.c.l.b16 %v2198
    %v2682 = vunpack.c.h.b16 %v2198
    %v2683 = vunpack.c.l.b16 %v2199
    %v2684 = vunpack.c.h.b16 %v2199
    %v2685 = vunpack.c.l.b16 %v2200
    %v2686 = vunpack.c.h.b16 %v2200
    %v2687 = vunpack.c.l.b16 %v2201
    %v2688 = vunpack.c.h.b16 %v2201
    %v2689 = vunpack.c.l.b16 %v2202
    %v2690 = vunpack.c.h.b16 %v2202
    %v2691 = vunpack.c.l.b16 %v2203
    %v2692 = vunpack.c.h.b16 %v2203
    %v2693 = vunpack.c.l.b16 %v2204
    %v2694 = vunpack.c.h.b16 %v2204
    %v2695 = vunpack.c.l.b16 %v2205
    %v2696 = vunpack.c.l.b16 %v2206
    %v2697 = vunpack.c.h.b16 %v2206
    %v2698 = vunpack.c.l.b16 %v2207
    %v2699 = vunpack.c.h.b16 %v2207
    %v2700 = vunpack.c.l.b16 %v2208
    %v2701 = vunpack.c.h.b16 %v2208
    %v2702 = vunpack.c.l.b16 %v2209
    %v2703 = vunpack.c.h.b16 %v2209
    %v2704 = vunpack.c.l.b16 %v2210
    %v2705 = vunpack.c.h.b16 %v2210
    %v2706 = vunpack.c.l.b16 %v2211
    %v2707 = vunpack.c.h.b16 %v2211
    %v2708 = vunpack.c.l.b16 %v2212
    %v2709 = vunpack.c.h.b16 %v2212
    %v2710 = vunpack.c.l.b16 %v2213
    %v2711 = vunpack.c.h.b16 %v2213
    %v2712 = vunpack.c.l.b16 %v2214
    %v2713 = vunpack.c.h.b16 %v2214
    %v2714 = vunpack.c.l.b16 %v2215
    %v2715 = vunpack.c.l.b16 %v2216
    %v2716 = vunpack.c.h.b16 %v2216
    %v2717 = vunpack.c.l.b16 %v2217
    %v2718 = vunpack.c.h.b16 %v2217
    %v2719 = vunpack.c.l.b16 %v2218
    %v2720 = vunpack.c.h.b16 %v2218
    %v2721 = vunpack.c.l.b16 %v2219
    %v2722 = vunpack.c.h.b16 %v2219
    %v2723 = vunpack.c.l.b16 %v2220
    %v2724 = vunpack.c.h.b16 %v2220
    %v2725 = vunpack.c.l.b16 %v2221
    %v2726 = vunpack.c.h.b16 %v2221
    %v2727 = vunpack.c.l.b16 %v2222
    %v2728 = vunpack.c.h.b16 %v2222
    %v2729 = vunpack.c.l.b16 %v2223
    %v2730 = vunpack.c.h.b16 %v2223
    %v2731 = vunpack.c.l.b16 %v2224
    %v2732 = vunpack.c.h.b16 %v2224
    %v2733 = vunpack.c.l.b16 %v2225
    %v2734 = vpack.c.b16 %v2449, %v2430
    %v2735 = vpack.c.b16 %v2450, %v2431
    %v2736 = vpack.c.b16 %v2451, %v2432
    %v2737 = vpack.c.b16 %v2452, %v2433
    %v2738 = vpack.c.b16 %v2453, %v2434
    %v2739 = vpack.c.b16 %v2454, %v2435
    %v2740 = vpack.c.b16 %v2455, %v2436
    %v2741 = vpack.c.b16 %v2456, %v2437
    %v2742 = vpack.c.b16 %v2457, %v2438
    %v2743 = vpack.c.b16 %v2458, %v2439
    %v2744 = vpack.c.b16 %v2459, %v2440
    %v2745 = vpack.c.b16 %v2460, %v2441
    %v2746 = vpack.c.b16 %v2461, %v2442
    %v2747 = vpack.c.b16 %v2462, %v2443
    %v2748 = vpack.c.b16 %v2463, %v2444
    %v2749 = vpack.c.b16 %v2464, %v2445
    %v2750 = vpack.c.b16 %v2465, %v2446
    %v2751 = vpack.c.b16 %v2466, %v2447
    %v2752 = vpack.c.b16 %v2467, %v2448
    %v2753 = vpack.c.b16 %v2487, %v2468
    %v2754 = vpack.c.b16 %v2488, %v2469
    %v2755 = vpack.c.b16 %v2489, %v2470
    %v2756 = vpack.c.b16 %v2490, %v2471
    %v2757 = vpack.c.b16 %v2491, %v2472
    %v2758 = vpack.c.b16 %v2492, %v2473
    %v2759 = vpack.c.b16 %v2493, %v2474
    %v2760 = vpack.c.b16 %v2494, %v2475
    %v2761 = vpack.c.b16 %v2495, %v2476
    %v2762 = vpack.c.b16 %v2496, %v2477
    %v2763 = vpack.c.b16 %v2497, %v2478
    %v2764 = vpack.c.b16 %v2498, %v2479
    %v2765 = vpack.c.b16 %v2499, %v2480
    %v2766 = vpack.c.b16 %v2500, %v2481
    %v2767 = vpack.c.b16 %v2501, %v2482
    %v2768 = vpack.c.b16 %v2502, %v2483
    %v2769 = vpack.c.b16 %v2503, %v2484
    %v2770 = vpack.c.b16 %v2504, %v2485
    %v2771 = vpack.c.b16 %v2505, %v2486
    %v2772 = vpack.c.b16 %v2525, %v2506
    %v2773 = vpack.c.b16 %v2526, %v2507
    %v2774 = vpack.c.b16 %v2527, %v2508
    %v2775 = vpack.c.b16 %v2528, %v2509
    %v2776 = vpack.c.b16 %v2529, %v2510
    %v2777 = vpack.c.b16 %v2530, %v2511
    %v2778 = vpack.c.b16 %v2531, %v2512
    %v2779 = vpack.c.b16 %v2532, %v2513
    %v2780 = vpack.c.b16 %v2533, %v2514
    %v2781 = vpack.c.b16 %v2534, %v2515
    %v2782 = vpack.c.b16 %v2535, %v2516
    %v2783 = vpack.c.b16 %v2536, %v2517
    %v2784 = vpack.c.b16 %v2537, %v2518
    %v2785 = vpack.c.b16 %v2538, %v2519
    %v2786 = vpack.c.b16 %v2539, %v2520
    %v2787 = vpack.c.b16 %v2540, %v2521
    %v2788 = vpack.c.b16 %v2541, %v2522
    %v2789 = vpack.c.b16 %v2542, %v2523
    %v2790 = vpack.c.b16 %v2543, %v2524
    %v2791 = vpack.c.b16 %v2563, %v2544
    %v2792 = vpack.c.b16 %v2564, %v2545
    %v2793 = vpack.c.b16 %v2565, %v2546
    %v2794 = vpack.c.b16 %v2566, %v2547
    %v2795 = vpack.c.b16 %v2567, %v2548
    %v2796 = vpack.c.b16 %v2568, %v2549
    %v2797 = vpack.c.b16 %v2569, %v2550
    %v2798 = vpack.c.b16 %v2570, %v2551
    %v2799 = vpack.c.b16 %v2571, %v2552
    %v2800 = vpack.c.b16 %v2572, %v2553
    %v2801 = vpack.c.b16 %v2573, %v2554
    %v2802 = vpack.c.b16 %v2574, %v2555
    %v2803 = vpack.c.b16 %v2575, %v2556
    %v2804 = vpack.c.b16 %v2576, %v2557
    %v2805 = vpack.c.b16 %v2577, %v2558
    %v2806 = vpack.c.b16 %v2578, %v2559
    %v2807 = vpack.c.b16 %v2579, %v2560
    %v2808 = vpack.c.b16 %v2580, %v2561
    %v2809 = vpack.c.b16 %v2581, %v2562
    %v2810 = vpack.c.b16 %v2601, %v2582
    %v2811 = vpack.c.b16 %v2602, %v2583
    %v2812 = vpack.c.b16 %v2603, %v2584
    %v2813 = vpack.c.b16 %v2604, %v2585
    %v2814 = vpack.c.b16 %v2605, %v2586
    %v2815 = vpack.c.b16 %v2606, %v2587
    %v2816 = vpack.c.b16 %v2607, %v2588
    %v2817 = vpack.c.b16 %v2608, %v2589
    %v2818 = vpack.c.b16 %v2609, %v2590
    %v2819 = vpack.c.b16 %v2610, %v2591
    %v2820 = vpack.c.b16 %v2611, %v2592
    %v2821 = vpack.c.b16 %v2612, %v2593
    %v2822 = vpack.c.b16 %v2613, %v2594
    %v2823 = vpack.c.b16 %v2614, %v2595
    %v2824 = vpack.c.b16 %v2615, %v2596
    %v2825 = vpack.c.b16 %v2616, %v2597
    %v2826 = vpack.c.b16 %v2617, %v2598
    %v2827 = vpack.c.b16 %v2618, %v2599
    %v2828 = vpack.c.b16 %v2619, %v2600
    %v2829 = vpack.c.b16 %v2639, %v2620
    %v2830 = vpack.c.b16 %v2640, %v2621
    %v2831 = vpack.c.b16 %v2641, %v2622
    %v2832 = vpack.c.b16 %v2642, %v2623
    %v2833 = vpack.c.b16 %v2643, %v2624
    %v2834 = vpack.c.b16 %v2644, %v2625
    %v2835 = vpack.c.b16 %v2645, %v2626
    %v2836 = vpack.c.b16 %v2646, %v2627
    %v2837 = vpack.c.b16 %v2647, %v2628
    %v2838 = vpack.c.b16 %v2648, %v2629
    %v2839 = vpack.c.b16 %v2649, %v2630
    %v2840 = vpack.c.b16 %v2650, %v2631
    %v2841 = vpack.c.b16 %v2651, %v2632
    %v2842 = vpack.c.b16 %v2652, %v2633
    %v2843 = vpack.c.b16 %v2653, %v2634
    %v2844 = vpack.c.b16 %v2654, %v2635
    %v2845 = vpack.c.b16 %v2655, %v2636
    %v2846 = vpack.c.b16 %v2656, %v2637
    %v2847 = vpack.c.b16 %v2657, %v2638
    %v2848 = vpack.c.b16 %v2677, %v2658
    %v2849 = vpack.c.b16 %v2678, %v2659
    %v2850 = vpack.c.b16 %v2679, %v2660
    %v2851 = vpack.c.b16 %v2680, %v2661
    %v2852 = vpack.c.b16 %v2681, %v2662
    %v2853 = vpack.c.b16 %v2682, %v2663
    %v2854 = vpack.c.b16 %v2683, %v2664
    %v2855 = vpack.c.b16 %v2684, %v2665
    %v2856 = vpack.c.b16 %v2685, %v2666
    %v2857 = vpack.c.b16 %v2686, %v2667
    %v2858 = vpack.c.b16 %v2687, %v2668
    %v2859 = vpack.c.b16 %v2688, %v2669
    %v2860 = vpack.c.b16 %v2689, %v2670
    %v2861 = vpack.c.b16 %v2690, %v2671
    %v2862 = vpack.c.b16 %v2691, %v2672
    %v2863 = vpack.c.b16 %v2692, %v2673
    %v2864 = vpack.c.b16 %v2693, %v2674
    %v2865 = vpack.c.b16 %v2694, %v2675
    %v2866 = vpack.c.b16 %v2695, %v2676
    %v2867 = vpack.c.b16 %v2715, %v2696
    %v2868 = vpack.c.b16 %v2716, %v2697
    %v2869 = vpack.c.b16 %v2717, %v2698
    %v2870 = vpack.c.b16 %v2718, %v2699
    %v2871 = vpack.c.b16 %v2719, %v2700
    %v2872 = vpack.c.b16 %v2720, %v2701
    %v2873 = vpack.c.b16 %v2721, %v2702
    %v2874 = vpack.c.b16 %v2722, %v2703
    %v2875 = vpack.c.b16 %v2723, %v2704
    %v2876 = vpack.c.b16 %v2724, %v2705
    %v2877 = vpack.c.b16 %v2725, %v2706
    %v2878 = vpack.c.b16 %v2726, %v2707
    %v2879 = vpack.c.b16 %v2727, %v2708
    %v2880 = vpack.c.b16 %v2728, %v2709
    %v2881 = vpack.c.b16 %v2729, %v2710
    %v2882 = vpack.c.b16 %v2730, %v2711
    %v2883 = vpack.c.b16 %v2731, %v2712
    %v2884 = vpack.c.b16 %v2732, %v2713
    %v2885 = vpack.c.b16 %v2733, %v2714
    %3038 = vmatpush.bf16.msra.mxu0 %v2867
    %3039 = vmatpush.bf16.msra.mxu0 %v2848
    %3040 = vmatpush.bf16.msra.mxu0 %v2829
    %3041 = vmatpush.bf16.msra.mxu0 %v2810
    %3042 = vmatpush.bf16.msra.mxu0 %v2791
    %3043 = vmatpush.bf16.msra.mxu0 %v2772
    %3044 = vmatpush.bf16.msra.mxu0 %v2753
    %3045 = vmatpush.bf16.msra.mxu0 %v2734
    %3046 = vmatmul.bf16.gmra.mxu0 %v2065
    %v3047 = vpop.f32.mrf.mxu0
    %v3048 = vadd.f32 %v2232, %v3047
    %v3049 = vpop.f32.mrf.mxu0
    %3050 = vdwg.mxu0
    %3051 = vmatpush.bf16.msra.mxu0 %v2868
    %3052 = vmatpush.bf16.msra.mxu0 %v2849
    %3053 = vmatpush.bf16.msra.mxu0 %v2830
    %3054 = vmatpush.bf16.msra.mxu0 %v2811
    %3055 = vmatpush.bf16.msra.mxu0 %v2792
    %3056 = vmatpush.bf16.msra.mxu0 %v2773
    %3057 = vmatpush.bf16.msra.mxu0 %v2754
    %3058 = vmatpush.bf16.msra.mxu0 %v2735
    %3059 = vmatmul.bf16.gmra.mxu0 %v2065
    %v3060 = vpop.f32.mrf.mxu0
    %v3061 = vadd.f32 %v2233, %v3060
    %v3062 = vpop.f32.mrf.mxu0
    %3063 = vdwg.mxu0
    %3064 = vmatpush.bf16.msra.mxu0 %v2869
    %3065 = vmatpush.bf16.msra.mxu0 %v2850
    %3066 = vmatpush.bf16.msra.mxu0 %v2831
    %3067 = vmatpush.bf16.msra.mxu0 %v2812
    %3068 = vmatpush.bf16.msra.mxu0 %v2793
    %3069 = vmatpush.bf16.msra.mxu0 %v2774
    %3070 = vmatpush.bf16.msra.mxu0 %v2755
    %3071 = vmatpush.bf16.msra.mxu0 %v2736
    %3072 = vmatmul.bf16.gmra.mxu0 %v2065
    %v3073 = vpop.f32.mrf.mxu0
    %v3074 = vadd.f32 %v2234, %v3073
    %v3075 = vpop.f32.mrf.mxu0
    %3076 = vdwg.mxu0
    %3077 = vmatpush.bf16.msra.mxu0 %v2870
    %3078 = vmatpush.bf16.msra.mxu0 %v2851
    %3079 = vmatpush.bf16.msra.mxu0 %v2832
    %3080 = vmatpush.bf16.msra.mxu0 %v2813
    %3081 = vmatpush.bf16.msra.mxu0 %v2794
    %3082 = vmatpush.bf16.msra.mxu0 %v2775
    %3083 = vmatpush.bf16.msra.mxu0 %v2756
    %3084 = vmatpush.bf16.msra.mxu0 %v2737
    %3085 = vmatmul.bf16.gmra.mxu0 %v2065
    %v3086 = vpop.f32.mrf.mxu0
    %v3087 = vadd.f32 %v2235, %v3086
    %v3088 = vpop.f32.mrf.mxu0
    %3089 = vdwg.mxu0
    %3090 = vmatpush.bf16.msra.mxu0 %v2871
    %3091 = vmatpush.bf16.msra.mxu0 %v2852
    %3092 = vmatpush.bf16.msra.mxu0 %v2833
    %3093 = vmatpush.bf16.msra.mxu0 %v2814
    %3094 = vmatpush.bf16.msra.mxu0 %v2795
    %3095 = vmatpush.bf16.msra.mxu0 %v2776
    %3096 = vmatpush.bf16.msra.mxu0 %v2757
    %3097 = vmatpush.bf16.msra.mxu0 %v2738
    %3098 = vmatmul.bf16.gmra.mxu0 %v2065
    %v3099 = vpop.f32.mrf.mxu0
    %v3100 = vadd.f32 %v2236, %v3099
    %v3101 = vpop.f32.mrf.mxu0
    %3102 = vdwg.mxu0
    %3103 = vmatpush.bf16.msra.mxu0 %v2872
    %3104 = vmatpush.bf16.msra.mxu0 %v2853
    %3105 = vmatpush.bf16.msra.mxu0 %v2834
    %3106 = vmatpush.bf16.msra.mxu0 %v2815
    %3107 = vmatpush.bf16.msra.mxu0 %v2796
    %3108 = vmatpush.bf16.msra.mxu0 %v2777
    %3109 = vmatpush.bf16.msra.mxu0 %v2758
    %3110 = vmatpush.bf16.msra.mxu0 %v2739
    %3111 = vmatmul.bf16.gmra.mxu0 %v2065
    %v3112 = vpop.f32.mrf.mxu0
    %v3113 = vadd.f32 %v2237, %v3112
    %v3114 = vpop.f32.mrf.mxu0
    %3115 = vdwg.mxu0
    %3116 = vmatpush.bf16.msra.mxu0 %v2873
    %3117 = vmatpush.bf16.msra.mxu0 %v2854
    %3118 = vmatpush.bf16.msra.mxu0 %v2835
    %3119 = vmatpush.bf16.msra.mxu0 %v2816
    %3120 = vmatpush.bf16.msra.mxu0 %v2797
    %3121 = vmatpush.bf16.msra.mxu0 %v2778
    %3122 = vmatpush.bf16.msra.mxu0 %v2759
    %3123 = vmatpush.bf16.msra.mxu0 %v2740
    %3124 = vmatmul.bf16.gmra.mxu0 %v2065
    %v3125 = vpop.f32.mrf.mxu0
    %v3126 = vadd.f32 %v2238, %v3125
    %v3127 = vpop.f32.mrf.mxu0
    %3128 = vdwg.mxu0
    %3129 = vmatpush.bf16.msra.mxu0 %v2874
    %3130 = vmatpush.bf16.msra.mxu0 %v2855
    %3131 = vmatpush.bf16.msra.mxu0 %v2836
    %3132 = vmatpush.bf16.msra.mxu0 %v2817
    %3133 = vmatpush.bf16.msra.mxu0 %v2798
    %3134 = vmatpush.bf16.msra.mxu0 %v2779
    %3135 = vmatpush.bf16.msra.mxu0 %v2760
    %3136 = vmatpush.bf16.msra.mxu0 %v2741
    %3137 = vmatmul.bf16.gmra.mxu0 %v2065
    %v3138 = vpop.f32.mrf.mxu0
    %v3139 = vadd.f32 %v2239, %v3138
    %v3140 = vpop.f32.mrf.mxu0
    %3141 = vdwg.mxu0
    %3142 = vmatpush.bf16.msra.mxu0 %v2875
    %3143 = vmatpush.bf16.msra.mxu0 %v2856
    %3144 = vmatpush.bf16.msra.mxu0 %v2837
    %3145 = vmatpush.bf16.msra.mxu0 %v2818
    %3146 = vmatpush.bf16.msra.mxu0 %v2799
    %3147 = vmatpush.bf16.msra.mxu0 %v2780
    %3148 = vmatpush.bf16.msra.mxu0 %v2761
    %3149 = vmatpush.bf16.msra.mxu0 %v2742
    %3150 = vmatmul.bf16.gmra.mxu0 %v2065
    %v3151 = vpop.f32.mrf.mxu0
    %v3152 = vadd.f32 %v2240, %v3151
    %v3153 = vpop.f32.mrf.mxu0
    %3154 = vdwg.mxu0
    %3155 = vmatpush.bf16.msra.mxu0 %v2876
    %3156 = vmatpush.bf16.msra.mxu0 %v2857
    %3157 = vmatpush.bf16.msra.mxu0 %v2838
    %3158 = vmatpush.bf16.msra.mxu0 %v2819
    %3159 = vmatpush.bf16.msra.mxu0 %v2800
    %3160 = vmatpush.bf16.msra.mxu0 %v2781
    %3161 = vmatpush.bf16.msra.mxu0 %v2762
    %3162 = vmatpush.bf16.msra.mxu0 %v2743
    %3163 = vmatmul.bf16.gmra.mxu0 %v2065
    %v3164 = vpop.f32.mrf.mxu0
    %v3165 = vadd.f32 %v2241, %v3164
    %v3166 = vpop.f32.mrf.mxu0
    %3167 = vdwg.mxu0
    %3168 = vmatpush.bf16.msra.mxu0 %v2877
    %3169 = vmatpush.bf16.msra.mxu0 %v2858
    %3170 = vmatpush.bf16.msra.mxu0 %v2839
    %3171 = vmatpush.bf16.msra.mxu0 %v2820
    %3172 = vmatpush.bf16.msra.mxu0 %v2801
    %3173 = vmatpush.bf16.msra.mxu0 %v2782
    %3174 = vmatpush.bf16.msra.mxu0 %v2763
    %3175 = vmatpush.bf16.msra.mxu0 %v2744
    %3176 = vmatmul.bf16.gmra.mxu0 %v2065
    %v3177 = vpop.f32.mrf.mxu0
    %v3178 = vadd.f32 %v2242, %v3177
    %v3179 = vpop.f32.mrf.mxu0
    %3180 = vdwg.mxu0
    %3181 = vmatpush.bf16.msra.mxu0 %v2878
    %3182 = vmatpush.bf16.msra.mxu0 %v2859
    %3183 = vmatpush.bf16.msra.mxu0 %v2840
    %3184 = vmatpush.bf16.msra.mxu0 %v2821
    %3185 = vmatpush.bf16.msra.mxu0 %v2802
    %3186 = vmatpush.bf16.msra.mxu0 %v2783
    %3187 = vmatpush.bf16.msra.mxu0 %v2764
    %3188 = vmatpush.bf16.msra.mxu0 %v2745
    %3189 = vmatmul.bf16.gmra.mxu0 %v2065
    %v3190 = vpop.f32.mrf.mxu0
    %v3191 = vadd.f32 %v2243, %v3190
    %v3192 = vpop.f32.mrf.mxu0
    %3193 = vdwg.mxu0
    %3194 = vmatpush.bf16.msra.mxu0 %v2879
    %3195 = vmatpush.bf16.msra.mxu0 %v2860
    %3196 = vmatpush.bf16.msra.mxu0 %v2841
    %3197 = vmatpush.bf16.msra.mxu0 %v2822
    %3198 = vmatpush.bf16.msra.mxu0 %v2803
    %3199 = vmatpush.bf16.msra.mxu0 %v2784
    %3200 = vmatpush.bf16.msra.mxu0 %v2765
    %3201 = vmatpush.bf16.msra.mxu0 %v2746
    %3202 = vmatmul.bf16.gmra.mxu0 %v2065
    %v3203 = vpop.f32.mrf.mxu0
    %v3204 = vadd.f32 %v2244, %v3203
    %v3205 = vpop.f32.mrf.mxu0
    %3206 = vdwg.mxu0
    %3207 = vmatpush.bf16.msra.mxu0 %v2880
    %3208 = vmatpush.bf16.msra.mxu0 %v2861
    %3209 = vmatpush.bf16.msra.mxu0 %v2842
    %3210 = vmatpush.bf16.msra.mxu0 %v2823
    %3211 = vmatpush.bf16.msra.mxu0 %v2804
    %3212 = vmatpush.bf16.msra.mxu0 %v2785
    %3213 = vmatpush.bf16.msra.mxu0 %v2766
    %3214 = vmatpush.bf16.msra.mxu0 %v2747
    %3215 = vmatmul.bf16.gmra.mxu0 %v2065
    %v3216 = vpop.f32.mrf.mxu0
    %v3217 = vadd.f32 %v2245, %v3216
    %v3218 = vpop.f32.mrf.mxu0
    %3219 = vdwg.mxu0
    %3220 = vmatpush.bf16.msra.mxu0 %v2881
    %3221 = vmatpush.bf16.msra.mxu0 %v2862
    %3222 = vmatpush.bf16.msra.mxu0 %v2843
    %3223 = vmatpush.bf16.msra.mxu0 %v2824
    %3224 = vmatpush.bf16.msra.mxu0 %v2805
    %3225 = vmatpush.bf16.msra.mxu0 %v2786
    %3226 = vmatpush.bf16.msra.mxu0 %v2767
    %3227 = vmatpush.bf16.msra.mxu0 %v2748
    %3228 = vmatmul.bf16.gmra.mxu0 %v2065
    %v3229 = vpop.f32.mrf.mxu0
    %v3230 = vadd.f32 %v2246, %v3229
    %v3231 = vpop.f32.mrf.mxu0
    %3232 = vdwg.mxu0
    %3233 = vmatpush.bf16.msra.mxu0 %v2882
    %3234 = vmatpush.bf16.msra.mxu0 %v2863
    %3235 = vmatpush.bf16.msra.mxu0 %v2844
    %3236 = vmatpush.bf16.msra.mxu0 %v2825
    %3237 = vmatpush.bf16.msra.mxu0 %v2806
    %3238 = vmatpush.bf16.msra.mxu0 %v2787
    %3239 = vmatpush.bf16.msra.mxu0 %v2768
    %3240 = vmatpush.bf16.msra.mxu0 %v2749
    %3241 = vmatmul.bf16.gmra.mxu0 %v2065
    %v3242 = vpop.f32.mrf.mxu0
    %v3243 = vadd.f32 %v2247, %v3242
    %v3244 = vpop.f32.mrf.mxu0
    %3245 = vdwg.mxu0
    %3246 = vmatpush.bf16.msra.mxu0 %v2883
    %3247 = vmatpush.bf16.msra.mxu0 %v2864
    %3248 = vmatpush.bf16.msra.mxu0 %v2845
    %3249 = vmatpush.bf16.msra.mxu0 %v2826
    %3250 = vmatpush.bf16.msra.mxu0 %v2807
    %3251 = vmatpush.bf16.msra.mxu0 %v2788
    %3252 = vmatpush.bf16.msra.mxu0 %v2769
    %3253 = vmatpush.bf16.msra.mxu0 %v2750
    %3254 = vmatmul.bf16.gmra.mxu0 %v2065
    %v3255 = vpop.f32.mrf.mxu0
    %v3256 = vadd.f32 %v2248, %v3255
    %v3257 = vpop.f32.mrf.mxu0
    %3258 = vdwg.mxu0
    %3259 = vmatpush.bf16.msra.mxu0 %v2884
    %3260 = vmatpush.bf16.msra.mxu0 %v2865
    %3261 = vmatpush.bf16.msra.mxu0 %v2846
    %3262 = vmatpush.bf16.msra.mxu0 %v2827
    %3263 = vmatpush.bf16.msra.mxu0 %v2808
    %3264 = vmatpush.bf16.msra.mxu0 %v2789
    %3265 = vmatpush.bf16.msra.mxu0 %v2770
    %3266 = vmatpush.bf16.msra.mxu0 %v2751
    %3267 = vmatmul.bf16.gmra.mxu0 %v2065
    %v3268 = vpop.f32.mrf.mxu0
    %v3269 = vadd.f32 %v2249, %v3268
    %v3270 = vpop.f32.mrf.mxu0
    %3271 = vdwg.mxu0
    %3272 = vmatpush.bf16.msra.mxu0 %v2885
    %3273 = vmatpush.bf16.msra.mxu0 %v2866
    %3274 = vmatpush.bf16.msra.mxu0 %v2847
    %3275 = vmatpush.bf16.msra.mxu0 %v2828
    %3276 = vmatpush.bf16.msra.mxu0 %v2809
    %3277 = vmatpush.bf16.msra.mxu0 %v2790
    %3278 = vmatpush.bf16.msra.mxu0 %v2771
    %3279 = vmatpush.bf16.msra.mxu0 %v2752
    %3280 = vmatmul.bf16.gmra.mxu0 %v2065
    %v3281 = vpop.f32.mrf.mxu0
    %v3282 = vadd.f32 %v2250, %v3281
    %v3283 = vpop.f32.mrf.mxu0
    %3284 = vdwg.mxu0
    %3285 = vst [vmem:[#allocation16] sm:$0xff] %v3048
    %3286 = vst [vmem:[#allocation16 + $0x8] sm:$0xff] %v3061
    %3287 = vst [vmem:[#allocation16 + $0x10] sm:$0xff] %v3074
    %3288 = vst [vmem:[#allocation16 + $0x18] sm:$0xff] %v3087
    %3289 = vst [vmem:[#allocation16 + $0x20] sm:$0xff] %v3100
    %3290 = vst [vmem:[#allocation16 + $0x28] sm:$0xff] %v3113
    %3291 = vst [vmem:[#allocation16 + $0x30] sm:$0xff] %v3126
    %3292 = vst [vmem:[#allocation16 + $0x38] sm:$0xff] %v3139
    %3293 = vst [vmem:[#allocation16 + $0x40] sm:$0xff] %v3152
    %3294 = vst [vmem:[#allocation16 + $0x48] sm:$0xff] %v3165
    %3295 = vst [vmem:[#allocation16 + $0x50] sm:$0xff] %v3178
    %3296 = vst [vmem:[#allocation16 + $0x58] sm:$0xff] %v3191
    %3297 = vst [vmem:[#allocation16 + $0x60] sm:$0xff] %v3204
    %3298 = vst [vmem:[#allocation16 + $0x68] sm:$0xff] %v3217
    %3299 = vst [vmem:[#allocation16 + $0x70] sm:$0xff] %v3230
    %3300 = vst [vmem:[#allocation16 + $0x78] sm:$0xff] %v3243
    %3301 = vst [vmem:[#allocation16 + $0x80] sm:$0xff] %v3256
    %3302 = vst [vmem:[#allocation16 + $0x88] sm:$0xff] %v3269
    %3303 = vst [vmem:[#allocation16 + $0x90] sm:$0xff] %v3282
    // Predicated region
    $region74: #{tpu_custom_call.1} parent=1 // pred_check
      _
    $region75: #{tpu_custom_call.1} parent=1 // pred_check_branch
      %3305 = sbr.rel (0) target = $region77
    $region76: #{tpu_custom_call.1} parent=1 // pred_region
      %3307 = vsyncadd [#allocation4], 0
      %s3309 = sshll.u32 [#allocation16], 4
      %s3310 = int_to_ptr.vmem [resolvable:$true] %s3309
      %s3311 = sshll.u32 %s10, 4
      %s3312 = int_to_ptr.hbm [resolvable:$true] %s3311
      %3314 = dma.vmem_to_hbm [thread:$0]  %s3310, 2432, %s3312, [#allocation4]
    $region77: #{tpu_custom_call.1} parent=1 // pred_fallthru
      _
    // Predicated region
    $region78: #{tpu_custom_call.1} parent=1 // pred_check
      _
    $region79: #{tpu_custom_call.1} parent=1 // pred_check_branch
      %3316 = sbr.rel (0) target = $region81
    $region80: #{tpu_custom_call.1} parent=1 // pred_region
      %3318 = dma.done [#allocation4], 2432
    $region81: #{tpu_custom_call.1} parent=1 // pred_fallthru
      _
    %3319 = vsyncpa [#allocation3], 1
    %3320 = vsyncpa [#allocation6], 1
    %3321 = vsyncpa [#allocation9], 1
    %3322 = vsyncpa [#allocation12], 1
    %3323 = vsyncpa [#allocation15], 1
    %3324 = vsyncpa [#allocation4], 1

</llo_original>
